<compile_context>
chip_gen: v5e
topology: v5e:2x2
jax: 0.10.0
libtpu: 0.0.40
codegen_flags: <defaults>
</compile_context>

<pallas_src>
import jax
import jax.numpy as jnp
from jax.experimental import pallas as pl
from jax.experimental.pallas import tpu as pltpu

NEG_SLOPE = 0.01                      # torch.nn.LeakyReLU default
N_SENSORS = 9
SENSOR_CHANNELS = (3, 1, 1, 1, 1, 3, 2, 3, 3)   # e4Acc..mMag in_channel_num
C_PAD = 8                             # padded per-sensor input-channel width
CH = 8                                # CausalCNN "channels"
RED = 16                              # reduced_size
ENC_OUT = 32                          # encoder out_channels
FEAT = N_SENSORS * ENC_OUT            # 288
HID = 128                             # classifier hidden
X_W = N_SENSORS * C_PAD               # 72 packed input width
Z_W = N_SENSORS * CH                  # 72
R_W = N_SENSORS * RED                 # 144
MIN_TILE = 16                         # bf16 sublane packing
NEG_BIG = -1e30                       # dummy-class bias (exp underflows to 0)


def _leaky(x):
    return jnp.where(x > 0, x, NEG_SLOPE * x)


def _q(t):
    """Round values to bf16 precision, keep f32 container (models bf16 MXU operands)."""
    return t.astype(jnp.bfloat16).astype(jnp.float32)


def _round_up(n, m):
    return (n + m - 1) // m * m


def _cdiv(a, b):
    return -(-a // b)


# ----------------------------- Pallas kernel --------------------------------
def lifelog_kernel(x_ref, w1m_ref, b1m_ref, w72_ref, b72_ref,
                   w3m_ref, b3m_ref, w3b_ref, b3b_ref, wl_ref, bl_ref,
                   wc1_ref, bc1_ref, wc2_ref, bc2_ref, out_ref):
    f32 = jnp.float32

    def mm(a, w):
        # One wide MXU matmul: bf16 operands, f32 accumulation.  Every activation
        # feeds exactly one matmul, so each bf16 cast happens exactly once.
        return jnp.dot(a.astype(jnp.bfloat16), w, preferred_element_type=f32)

    x = x_ref[...]                                        # (TILE_N, 72) bf16

    # CausalConvolutionBlock 1: c_in -> 8 (dilation 1), 1x1-conv residual.
    # Main-path first conv and residual conv share LHS x -> one merged (72,144) matmul.
    y1 = mm(x, w1m_ref[...]) + b1m_ref[...]               # (TILE_N, 144) f32
    h = _leaky(y1[:, :Z_W])
    h = _leaky(mm(h, w72_ref[0]) + b72_ref[0:1, :])
    z1 = h + y1[:, Z_W:]                                  # (TILE_N, 72) f32

    # CausalConvolutionBlock 2: 8 -> 8 (dilation 2), identity residual.
    h = _leaky(mm(z1, w72_ref[1]) + b72_ref[1:2, :])
    h = _leaky(mm(h, w72_ref[2]) + b72_ref[2:3, :])
    z2 = h + z1                                           # (TILE_N, 72)

    # CausalConvolutionBlock 3: 8 -> 16 (dilation 4), 1x1-conv residual.
    # Main-path first conv and residual conv share LHS z2 -> one merged (72,288) matmul.
    y3 = mm(z2, w3m_ref[...]) + b3m_ref[...]              # (TILE_N, 288) f32
    h = _leaky(y3[:, :R_W])
    h = _leaky(mm(h, w3b_ref[...]) + b3b_ref[...])
    z3 = h + y3[:, R_W:]                                  # (TILE_N, 144)

    # AdaptiveMaxPool1d(1) over a length-1 sequence is the identity.  The block-diagonal
    # Linear(16,32) directly produces the concatenated (TILE_N, 288) feature slab in the
    # original torch.cat sensor order -> no in-kernel concatenate.
    feat = mm(z3, wl_ref[...]) + bl_ref[...]

    # classifier: LeakyReLU -> Linear(288,128) -> LeakyReLU -> Linear(128,C) -> LogSoftmax
    f = _leaky(feat)
    h = _leaky(mm(f, wc1_ref[...]) + bc1_ref[...])
    # wc2/bc2 are lane-padded to 128 output columns; dummy columns carry a -1e30 bias so
    # they contribute exp(...) == 0 to the log-softmax normalizer.
    logits = mm(h, wc2_ref[...]) + bc2_ref[...]           # (TILE_N, OUT_W)
    m = jnp.max(logits, axis=1, keepdims=True)
    s = logits - m
    lse = jnp.log(jnp.sum(jnp.exp(s), axis=1, keepdims=True))
    out_ref[...] = s - lse


# ----------------------------- parameter packing ------------------------------
def pack_kernel_params(ps, clf):
    """Last conv tap, transpose to (in, out), zero-pad input channels, assemble
    block-diagonal per-stage matrices, merge same-LHS stages along the output axis,
    group by shape, cast weights to bf16, lane-pad the final classifier layer."""

    def tap_T(p, name, pad_to=None):
        w = p[name]
        w = (w[:, :, -1] if w.ndim == 3 else w).T       # (in, out)
        if pad_to is not None and w.shape[0] < pad_to:
            w = jnp.pad(w, ((0, pad_to - w.shape[0]), (0, 0)))
        return w

    def bdiag(name, pad_to=None):
        return jax.scipy.linalg.block_diag(*[tap_T(p, name, pad_to) for p in ps])

    def bcat(name):
        return jnp.concatenate([p[name] for p in ps])

    bf16 = jnp.bfloat16

    # Block 1: merged main + residual (both consume x).
    w1m = jnp.concatenate([bdiag('w1a', C_PAD), bdiag('wr1', C_PAD)],
                          axis=1).astype(bf16)                        # (72, 144)
    b1m = jnp.concatenate([bcat('b1a'), bcat('br1')])[None, :]        # (1, 144) f32

    # Remaining 72x72 stages, stacked.
    w72 = jnp.stack([bdiag('w1b'), bdiag('w2a'), bdiag('w2b')]).astype(bf16)  # (3,72,72)
    b72 = jnp.stack([bcat('b1b'), bcat('b2a'), bcat('b2b')])                  # (3,72)

    # Block 3: merged main + residual (both consume z2).
    w3m = jnp.concatenate([bdiag('w3a'), bdiag('wr3')], axis=1).astype(bf16)  # (72, 288)
    b3m = jnp.concatenate([bcat('b3a'), bcat('br3')])[None, :]                # (1, 288)

    w3b = bdiag('w3b').astype(bf16)                                   # (144, 144)
    b3b = bcat('b3b')[None, :]                                        # (1, 144)
    wl = bdiag('wl').astype(bf16)                                     # (144, 288)
    bl = bcat('bl')[None, :]                                          # (1, 288)

    wc1 = clf['wc1'].T.astype(bf16)                                   # (288, 128)
    bc1 = clf['bc1'][None, :]                                         # (1, 128)

    # Final layer lane-padded to a 128-multiple of output columns.
    class_num = clf['wc2'].shape[0]
    out_w = max(128, _round_up(class_num, 128))
    wc2 = jnp.pad(clf['wc2'].T, ((0, 0), (0, out_w - class_num))).astype(bf16)  # (128,out_w)
    bc2 = jnp.pad(clf['bc2'], (0, out_w - class_num),
                  constant_values=NEG_BIG)[None, :]                   # (1, out_w)

    params = [w1m, b1m, w72, b72, w3m, b3m, w3b, b3b, wl, bl, wc1, bc1, wc2, bc2]
    return params, out_w


# ----------------------------- wrapper ---------------------------------------
def _choose_tile(n, max_tile=1024):
    """tile_n derived from n: tiles <= max_tile with minimal round-up padding, and at
    least 2 grid steps (when n allows) so dimension_semantics=("parallel",) can shard
    across both TensorCores on megacore/v7x."""
    tiles = max(_cdiv(n, max_tile), 1)
    if tiles < 2 and n >= 2 * MIN_TILE:
        tiles = 2
    tile_n = _round_up(_cdiv(n, tiles), MIN_TILE)
    n_pad = _round_up(n, tile_n)
    return tile_n, n_pad


def lifelog_pallas(xs, ilnet_params, clf, class_num, max_tile=1024):
    n = xs[0].shape[0]
    # Pack inputs: pad each sensor's channels to 8, concat -> (N, 72), cast to bf16.
    x_packed = jnp.concatenate([
        jnp.pad(x.reshape(n, c).astype(jnp.float32), ((0, 0), (0, C_PAD - c)))
        for x, c in zip(xs, SENSOR_CHANNELS)
    ], axis=1).astype(jnp.bfloat16)                                  # (N, 72)

    tile_n, n_pad = _choose_tile(n, max_tile)
    if n_pad > n:
        x_packed = jnp.pad(x_packed, ((0, n_pad - n), (0, 0)))

    params, out_w = pack_kernel_params(ilnet_params, clf)

    def full_spec(a):
        nd = a.ndim
        return pl.BlockSpec(a.shape, lambda i, _nd=nd: (0,) * _nd)   # resident weights

    out = pl.pallas_call(
        lifelog_kernel,
        out_shape=jax.ShapeDtypeStruct((n_pad, out_w), jnp.float32),
        grid=(n_pad // tile_n,),
        in_specs=[pl.BlockSpec((tile_n, X_W), lambda i: (i, 0))]
                 + [full_spec(a) for a in params],
        out_specs=pl.BlockSpec((tile_n, out_w), lambda i: (i, 0)),
        compiler_params=pltpu.CompilerParams(dimension_semantics=("parallel",)),
    )(x_packed, *params)
    return out[:n, :class_num]


# ----------------------------- parameter init ---------------------------------
def init_ilnet_params(keys_iter, c_in):
    """Full CausalCNNEncoder(in=c_in, channels=8, depth=2, reduced=16, out=32, k=3) params,
    values rounded to bf16 precision (matches the kernel's MXU operand precision)."""
    nrm = lambda shape, s=0.2: _q(s * jax.random.normal(next(keys_iter), shape,
                                                        dtype=jnp.float32))
    p = {}
    p['w1a'] = nrm((CH, c_in, 3));  p['b1a'] = nrm((CH,))
    p['w1b'] = nrm((CH, CH, 3));    p['b1b'] = nrm((CH,))
    p['wr1'] = nrm((CH, c_in, 1));  p['br1'] = nrm((CH,))
    p['w2a'] = nrm((CH, CH, 3));    p['b2a'] = nrm((CH,))
    p['w2b'] = nrm((CH, CH, 3));    p['b2b'] = nrm((CH,))
    p['w3a'] = nrm((RED, CH, 3));   p['b3a'] = nrm((RED,))
    p['w3b'] = nrm((RED, RED, 3));  p['b3b'] = nrm((RED,))
    p['wr3'] = nrm((RED, CH, 1));   p['br3'] = nrm((RED,))
    p['wl'] = nrm((ENC_OUT, RED));  p['bl'] = nrm((ENC_OUT,))
    return p


# ----------------------------- pure-JAX reference ----------------------------
# Faithful per-sensor structure (causal dilated convs + chomp, residuals, adaptive max
# pool, per-sensor Linear, concat, classifier, log-softmax).  Matmul/conv *operands* are
# rounded to bf16 precision (same points the kernel casts), accumulation stays f32.
def _conv1d(x, w, b, dilation):
    pad = (w.shape[2] - 1) * dilation
    y = jax.lax.conv_general_dilated(
        _q(x), w, window_strides=(1,), padding=[(pad, pad)],
        rhs_dilation=(dilation,), dimension_numbers=('NCH', 'OIH', 'NCH'))
    return y[:, :, :x.shape[2]] + b[None, :, None]


def _block_ref(x, wa, ba, wb, bb, wr, br, dilation):
    h = _leaky(_conv1d(x, wa, ba, dilation))
    h = _leaky(_conv1d(h, wb, bb, dilation))
    res = x if wr is None else _conv1d(x, wr, br, 1)
    return h + res


def _ilnet_ref(x, p, c_in):
    x = x.reshape(-1, c_in, 1)
    z = _block_ref(x, p['w1a'], p['b1a'], p['w1b'], p['b1b'], p['wr1'], p['br1'], 1)
    z = _block_ref(z, p['w2a'], p['b2a'], p['w2b'], p['b2b'], None, None, 2)
    z = _block_ref(z, p['w3a'], p['b3a'], p['w3b'], p['b3b'], p['wr3'], p['br3'], 4)
    z = jnp.max(z, axis=2)                     # AdaptiveMaxPool1d(1) + squeeze
    return _q(z) @ p['wl'].T + p['bl']


def lifelog_ref(xs, ilnet_params, clf):
    feats = [_ilnet_ref(x, p, c).reshape(x.shape[0], 1, -1)
             for x, p, c in zip(xs, ilnet_params, SENSOR_CHANNELS)]
    f = jnp.concatenate(feats, axis=1).reshape(-1, FEAT)
    f = _leaky(f)
    h = _leaky(_q(f) @ clf['wc1'].T + clf['bc1'])
    logits = _q(h) @ clf['wc2'].T + clf['bc2']
    return jax.nn.log_softmax(logits, axis=1)


# ----------------------------- main -------------------------------------------
if __name__ == "__main__":
    N = 8
    CLASS_NUM = 10

    key = jax.random.PRNGKey(0)
    k_params, k_inputs = jax.random.split(key)
    keys = iter(jax.random.split(k_params, 256))

    ilnet_params = [init_ilnet_params(keys, c) for c in SENSOR_CHANNELS]
    clf = {
        'wc1': _q(0.1 * jax.random.normal(next(keys), (HID, FEAT), jnp.float32)),
        'bc1': _q(0.1 * jax.random.normal(next(keys), (HID,), jnp.float32)),
        'wc2': _q(0.1 * jax.random.normal(next(keys), (CLASS_NUM, HID), jnp.float32)),
        'bc2': _q(0.1 * jax.random.normal(next(keys), (CLASS_NUM,), jnp.float32)),
    }

    xkeys = jax.random.split(k_inputs, N_SENSORS)
    xs = [_q(jax.random.normal(k, (N, c), jnp.float32))
          for k, c in zip(xkeys, SENSOR_CHANNELS)]

    out = lifelog_pallas(xs, ilnet_params, clf, CLASS_NUM)
    out = jax.block_until_ready(out)

    ref = lifelog_ref(xs, ilnet_params, clf)
    assert out.shape == (N, CLASS_NUM)
    assert jnp.allclose(out, ref, atol=1e-3, rtol=1e-3), float(jnp.max(jnp.abs(out - ref)))
    print("KERNEL_OK")
</pallas_src>

<mosaic_0001>
module attributes {stable_mosaic.version = 11 : i64} {
  func.func @lifelog_kernel(%arg0: i32, %arg1: memref<16x72xbf16, #tpu.memory_space<vmem>>, %arg2: memref<72x144xbf16, #tpu.memory_space<vmem>>, %arg3: memref<1x144xf32, #tpu.memory_space<vmem>>, %arg4: memref<3x72x72xbf16, #tpu.memory_space<vmem>>, %arg5: memref<3x72xf32, #tpu.memory_space<vmem>>, %arg6: memref<72x288xbf16, #tpu.memory_space<vmem>>, %arg7: memref<1x288xf32, #tpu.memory_space<vmem>>, %arg8: memref<144x144xbf16, #tpu.memory_space<vmem>>, %arg9: memref<1x144xf32, #tpu.memory_space<vmem>>, %arg10: memref<144x288xbf16, #tpu.memory_space<vmem>>, %arg11: memref<1x288xf32, #tpu.memory_space<vmem>>, %arg12: memref<288x128xbf16, #tpu.memory_space<vmem>>, %arg13: memref<1x128xf32, #tpu.memory_space<vmem>>, %arg14: memref<128x128xbf16, #tpu.memory_space<vmem>>, %arg15: memref<1x128xf32, #tpu.memory_space<vmem>>, %arg16: memref<16x128xf32, #tpu.memory_space<vmem>>) attributes {dimension_semantics = [#tpu.dimension_semantics<parallel>], iteration_bounds = array<i64: 1>, scalar_prefetch = 0 : i64, scratch_operands = 0 : i64, tpu.core_type = #tpu.core_type<tc>, window_params = [{transform_indices = @transform_0, window_bounds = array<i64: 16, 72>}, {pipeline_mode = #tpu.pipeline_mode<synchronous>, transform_indices = @transform_1, window_bounds = array<i64: 72, 144>}, {pipeline_mode = #tpu.pipeline_mode<synchronous>, transform_indices = @transform_2, window_bounds = array<i64: 1, 144>}, {pipeline_mode = #tpu.pipeline_mode<synchronous>, transform_indices = @transform_3, window_bounds = array<i64: 3, 72, 72>}, {pipeline_mode = #tpu.pipeline_mode<synchronous>, transform_indices = @transform_4, window_bounds = array<i64: 3, 72>}, {pipeline_mode = #tpu.pipeline_mode<synchronous>, transform_indices = @transform_5, window_bounds = array<i64: 72, 288>}, {pipeline_mode = #tpu.pipeline_mode<synchronous>, transform_indices = @transform_6, window_bounds = array<i64: 1, 288>}, {pipeline_mode = #tpu.pipeline_mode<synchronous>, transform_indices = @transform_7, window_bounds = array<i64: 144, 144>}, {pipeline_mode = #tpu.pipeline_mode<synchronous>, transform_indices = @transform_8, window_bounds = array<i64: 1, 144>}, {pipeline_mode = #tpu.pipeline_mode<synchronous>, transform_indices = @transform_9, window_bounds = array<i64: 144, 288>}, {pipeline_mode = #tpu.pipeline_mode<synchronous>, transform_indices = @transform_10, window_bounds = array<i64: 1, 288>}, {pipeline_mode = #tpu.pipeline_mode<synchronous>, transform_indices = @transform_11, window_bounds = array<i64: 288, 128>}, {pipeline_mode = #tpu.pipeline_mode<synchronous>, transform_indices = @transform_12, window_bounds = array<i64: 1, 128>}, {pipeline_mode = #tpu.pipeline_mode<synchronous>, transform_indices = @transform_13, window_bounds = array<i64: 128, 128>}, {pipeline_mode = #tpu.pipeline_mode<synchronous>, transform_indices = @transform_14, window_bounds = array<i64: 1, 128>}, {transform_indices = @transform_15, window_bounds = array<i64: 16, 128>}]} {
    %c0 = arith.constant 0 : index
    %c0_0 = arith.constant 0 : index
    %0 = vector.load %arg1[%c0, %c0_0] : memref<16x72xbf16, #tpu.memory_space<vmem>>, vector<16x72xbf16>
    %c0_1 = arith.constant 0 : index
    %c0_2 = arith.constant 0 : index
    %1 = vector.load %arg2[%c0_1, %c0_2] : memref<72x144xbf16, #tpu.memory_space<vmem>>, vector<72x144xbf16>
    %cst = arith.constant dense<0.000000e+00> : vector<16x144xf32>
    %2 = tpu.matmul %0, %1, %cst {dimension_numbers = #tpu.dot_dimension_numbers<[1], [0], [0], [1], [0, 0, 1, 1], [], []>} : vector<16x72xbf16>, vector<72x144xbf16>, vector<16x144xf32> -> vector<16x144xf32>
    %c0_3 = arith.constant 0 : index
    %c0_4 = arith.constant 0 : index
    %3 = vector.load %arg3[%c0_3, %c0_4] : memref<1x144xf32, #tpu.memory_space<vmem>>, vector<1x144xf32>
    %4 = vector.broadcast %3 : vector<1x144xf32> to vector<16x144xf32>
    %5 = arith.addf %2, %4 : vector<16x144xf32>
    %6 = vector.extract_strided_slice %5 {offsets = [0, 0], sizes = [16, 72], strides = [1, 1]} : vector<16x144xf32> to vector<16x72xf32>
    %cst_5 = arith.constant 0.000000e+00 : f32
    %7 = vector.broadcast %cst_5 : f32 to vector<16x72xf32>
    %8 = arith.cmpf ogt, %6, %7 : vector<16x72xf32>
    %cst_6 = arith.constant 0.00999999977 : f32
    %9 = vector.broadcast %cst_6 : f32 to vector<16x72xf32>
    %10 = arith.mulf %9, %6 : vector<16x72xf32>
    %11 = arith.select %8, %6, %10 : vector<16x72xi1>, vector<16x72xf32>
    %c0_7 = arith.constant 0 : index
    %c0_8 = arith.constant 0 : index
    %c0_9 = arith.constant 0 : index
    %12 = vector.load %arg4[%c0_7, %c0_8, %c0_9] : memref<3x72x72xbf16, #tpu.memory_space<vmem>>, vector<1x72x72xbf16>
    %13 = vector.shape_cast %12 : vector<1x72x72xbf16> to vector<72x72xbf16>
    %14 = arith.truncf %11 : vector<16x72xf32> to vector<16x72xbf16>
    %cst_10 = arith.constant dense<0.000000e+00> : vector<16x72xf32>
    %15 = tpu.matmul %14, %13, %cst_10 {dimension_numbers = #tpu.dot_dimension_numbers<[1], [0], [0], [1], [0, 0, 1, 1], [], []>} : vector<16x72xbf16>, vector<72x72xbf16>, vector<16x72xf32> -> vector<16x72xf32>
    %c0_11 = arith.constant 0 : index
    %c0_12 = arith.constant 0 : index
    %16 = vector.load %arg5[%c0_11, %c0_12] : memref<3x72xf32, #tpu.memory_space<vmem>>, vector<1x72xf32>
    %17 = vector.broadcast %16 : vector<1x72xf32> to vector<16x72xf32>
    %18 = arith.addf %15, %17 : vector<16x72xf32>
    %cst_13 = arith.constant 0.000000e+00 : f32
    %19 = vector.broadcast %cst_13 : f32 to vector<16x72xf32>
    %20 = arith.cmpf ogt, %18, %19 : vector<16x72xf32>
    %cst_14 = arith.constant 0.00999999977 : f32
    %21 = vector.broadcast %cst_14 : f32 to vector<16x72xf32>
    %22 = arith.mulf %21, %18 : vector<16x72xf32>
    %23 = arith.select %20, %18, %22 : vector<16x72xi1>, vector<16x72xf32>
    %24 = vector.extract_strided_slice %5 {offsets = [0, 72], sizes = [16, 72], strides = [1, 1]} : vector<16x144xf32> to vector<16x72xf32>
    %25 = arith.addf %23, %24 : vector<16x72xf32>
    %c1 = arith.constant 1 : index
    %c0_15 = arith.constant 0 : index
    %c0_16 = arith.constant 0 : index
    %26 = vector.load %arg4[%c1, %c0_15, %c0_16] : memref<3x72x72xbf16, #tpu.memory_space<vmem>>, vector<1x72x72xbf16>
    %27 = vector.shape_cast %26 : vector<1x72x72xbf16> to vector<72x72xbf16>
    %28 = arith.truncf %25 : vector<16x72xf32> to vector<16x72xbf16>
    %cst_17 = arith.constant dense<0.000000e+00> : vector<16x72xf32>
    %29 = tpu.matmul %28, %27, %cst_17 {dimension_numbers = #tpu.dot_dimension_numbers<[1], [0], [0], [1], [0, 0, 1, 1], [], []>} : vector<16x72xbf16>, vector<72x72xbf16>, vector<16x72xf32> -> vector<16x72xf32>
    %c1_18 = arith.constant 1 : index
    %c0_19 = arith.constant 0 : index
    %30 = vector.load %arg5[%c1_18, %c0_19] : memref<3x72xf32, #tpu.memory_space<vmem>>, vector<1x72xf32>
    %31 = vector.broadcast %30 : vector<1x72xf32> to vector<16x72xf32>
    %32 = arith.addf %29, %31 : vector<16x72xf32>
    %cst_20 = arith.constant 0.000000e+00 : f32
    %33 = vector.broadcast %cst_20 : f32 to vector<16x72xf32>
    %34 = arith.cmpf ogt, %32, %33 : vector<16x72xf32>
    %cst_21 = arith.constant 0.00999999977 : f32
    %35 = vector.broadcast %cst_21 : f32 to vector<16x72xf32>
    %36 = arith.mulf %35, %32 : vector<16x72xf32>
    %37 = arith.select %34, %32, %36 : vector<16x72xi1>, vector<16x72xf32>
    %c2 = arith.constant 2 : index
    %c0_22 = arith.constant 0 : index
    %c0_23 = arith.constant 0 : index
    %38 = vector.load %arg4[%c2, %c0_22, %c0_23] : memref<3x72x72xbf16, #tpu.memory_space<vmem>>, vector<1x72x72xbf16>
    %39 = vector.shape_cast %38 : vector<1x72x72xbf16> to vector<72x72xbf16>
    %40 = arith.truncf %37 : vector<16x72xf32> to vector<16x72xbf16>
    %cst_24 = arith.constant dense<0.000000e+00> : vector<16x72xf32>
    %41 = tpu.matmul %40, %39, %cst_24 {dimension_numbers = #tpu.dot_dimension_numbers<[1], [0], [0], [1], [0, 0, 1, 1], [], []>} : vector<16x72xbf16>, vector<72x72xbf16>, vector<16x72xf32> -> vector<16x72xf32>
    %c2_25 = arith.constant 2 : index
    %c0_26 = arith.constant 0 : index
    %42 = vector.load %arg5[%c2_25, %c0_26] : memref<3x72xf32, #tpu.memory_space<vmem>>, vector<1x72xf32>
    %43 = vector.broadcast %42 : vector<1x72xf32> to vector<16x72xf32>
    %44 = arith.addf %41, %43 : vector<16x72xf32>
    %cst_27 = arith.constant 0.000000e+00 : f32
    %45 = vector.broadcast %cst_27 : f32 to vector<16x72xf32>
    %46 = arith.cmpf ogt, %44, %45 : vector<16x72xf32>
    %cst_28 = arith.constant 0.00999999977 : f32
    %47 = vector.broadcast %cst_28 : f32 to vector<16x72xf32>
    %48 = arith.mulf %47, %44 : vector<16x72xf32>
    %49 = arith.select %46, %44, %48 : vector<16x72xi1>, vector<16x72xf32>
    %50 = arith.addf %49, %25 : vector<16x72xf32>
    %c0_29 = arith.constant 0 : index
    %c0_30 = arith.constant 0 : index
    %51 = vector.load %arg6[%c0_29, %c0_30] : memref<72x288xbf16, #tpu.memory_space<vmem>>, vector<72x288xbf16>
    %52 = arith.truncf %50 : vector<16x72xf32> to vector<16x72xbf16>
    %cst_31 = arith.constant dense<0.000000e+00> : vector<16x288xf32>
    %53 = tpu.matmul %52, %51, %cst_31 {dimension_numbers = #tpu.dot_dimension_numbers<[1], [0], [0], [1], [0, 0, 1, 1], [], []>} : vector<16x72xbf16>, vector<72x288xbf16>, vector<16x288xf32> -> vector<16x288xf32>
    %c0_32 = arith.constant 0 : index
    %c0_33 = arith.constant 0 : index
    %54 = vector.load %arg7[%c0_32, %c0_33] : memref<1x288xf32, #tpu.memory_space<vmem>>, vector<1x288xf32>
    %55 = vector.broadcast %54 : vector<1x288xf32> to vector<16x288xf32>
    %56 = arith.addf %53, %55 : vector<16x288xf32>
    %57 = vector.extract_strided_slice %56 {offsets = [0, 0], sizes = [16, 144], strides = [1, 1]} : vector<16x288xf32> to vector<16x144xf32>
    %cst_34 = arith.constant 0.000000e+00 : f32
    %58 = vector.broadcast %cst_34 : f32 to vector<16x144xf32>
    %59 = arith.cmpf ogt, %57, %58 : vector<16x144xf32>
    %cst_35 = arith.constant 0.00999999977 : f32
    %60 = vector.broadcast %cst_35 : f32 to vector<16x144xf32>
    %61 = arith.mulf %60, %57 : vector<16x144xf32>
    %62 = arith.select %59, %57, %61 : vector<16x144xi1>, vector<16x144xf32>
    %c0_36 = arith.constant 0 : index
    %c0_37 = arith.constant 0 : index
    %63 = vector.load %arg8[%c0_36, %c0_37] : memref<144x144xbf16, #tpu.memory_space<vmem>>, vector<144x144xbf16>
    %64 = arith.truncf %62 : vector<16x144xf32> to vector<16x144xbf16>
    %cst_38 = arith.constant dense<0.000000e+00> : vector<16x144xf32>
    %65 = tpu.matmul %64, %63, %cst_38 {dimension_numbers = #tpu.dot_dimension_numbers<[1], [0], [0], [1], [0, 0, 1, 1], [], []>} : vector<16x144xbf16>, vector<144x144xbf16>, vector<16x144xf32> -> vector<16x144xf32>
    %c0_39 = arith.constant 0 : index
    %c0_40 = arith.constant 0 : index
    %66 = vector.load %arg9[%c0_39, %c0_40] : memref<1x144xf32, #tpu.memory_space<vmem>>, vector<1x144xf32>
    %67 = vector.broadcast %66 : vector<1x144xf32> to vector<16x144xf32>
    %68 = arith.addf %65, %67 : vector<16x144xf32>
    %cst_41 = arith.constant 0.000000e+00 : f32
    %69 = vector.broadcast %cst_41 : f32 to vector<16x144xf32>
    %70 = arith.cmpf ogt, %68, %69 : vector<16x144xf32>
    %cst_42 = arith.constant 0.00999999977 : f32
    %71 = vector.broadcast %cst_42 : f32 to vector<16x144xf32>
    %72 = arith.mulf %71, %68 : vector<16x144xf32>
    %73 = arith.select %70, %68, %72 : vector<16x144xi1>, vector<16x144xf32>
    %74 = vector.extract_strided_slice %56 {offsets = [0, 144], sizes = [16, 144], strides = [1, 1]} : vector<16x288xf32> to vector<16x144xf32>
    %75 = arith.addf %73, %74 : vector<16x144xf32>
    %c0_43 = arith.constant 0 : index
    %c0_44 = arith.constant 0 : index
    %76 = vector.load %arg10[%c0_43, %c0_44] : memref<144x288xbf16, #tpu.memory_space<vmem>>, vector<144x288xbf16>
    %77 = arith.truncf %75 : vector<16x144xf32> to vector<16x144xbf16>
    %cst_45 = arith.constant dense<0.000000e+00> : vector<16x288xf32>
    %78 = tpu.matmul %77, %76, %cst_45 {dimension_numbers = #tpu.dot_dimension_numbers<[1], [0], [0], [1], [0, 0, 1, 1], [], []>} : vector<16x144xbf16>, vector<144x288xbf16>, vector<16x288xf32> -> vector<16x288xf32>
    %c0_46 = arith.constant 0 : index
    %c0_47 = arith.constant 0 : index
    %79 = vector.load %arg11[%c0_46, %c0_47] : memref<1x288xf32, #tpu.memory_space<vmem>>, vector<1x288xf32>
    %80 = vector.broadcast %79 : vector<1x288xf32> to vector<16x288xf32>
    %81 = arith.addf %78, %80 : vector<16x288xf32>
    %cst_48 = arith.constant 0.000000e+00 : f32
    %82 = vector.broadcast %cst_48 : f32 to vector<16x288xf32>
    %83 = arith.cmpf ogt, %81, %82 : vector<16x288xf32>
    %cst_49 = arith.constant 0.00999999977 : f32
    %84 = vector.broadcast %cst_49 : f32 to vector<16x288xf32>
    %85 = arith.mulf %84, %81 : vector<16x288xf32>
    %86 = arith.select %83, %81, %85 : vector<16x288xi1>, vector<16x288xf32>
    %c0_50 = arith.constant 0 : index
    %c0_51 = arith.constant 0 : index
    %87 = vector.load %arg12[%c0_50, %c0_51] : memref<288x128xbf16, #tpu.memory_space<vmem>>, vector<288x128xbf16>
    %88 = arith.truncf %86 : vector<16x288xf32> to vector<16x288xbf16>
    %cst_52 = arith.constant dense<0.000000e+00> : vector<16x128xf32>
    %89 = tpu.matmul %88, %87, %cst_52 {dimension_numbers = #tpu.dot_dimension_numbers<[1], [0], [0], [1], [0, 0, 1, 1], [], []>} : vector<16x288xbf16>, vector<288x128xbf16>, vector<16x128xf32> -> vector<16x128xf32>
    %c0_53 = arith.constant 0 : index
    %c0_54 = arith.constant 0 : index
    %90 = vector.load %arg13[%c0_53, %c0_54] : memref<1x128xf32, #tpu.memory_space<vmem>>, vector<1x128xf32>
    %91 = vector.broadcast %90 : vector<1x128xf32> to vector<16x128xf32>
    %92 = arith.addf %89, %91 : vector<16x128xf32>
    %cst_55 = arith.constant 0.000000e+00 : f32
    %93 = vector.broadcast %cst_55 : f32 to vector<16x128xf32>
    %94 = arith.cmpf ogt, %92, %93 : vector<16x128xf32>
    %cst_56 = arith.constant 0.00999999977 : f32
    %95 = vector.broadcast %cst_56 : f32 to vector<16x128xf32>
    %96 = arith.mulf %95, %92 : vector<16x128xf32>
    %97 = arith.select %94, %92, %96 : vector<16x128xi1>, vector<16x128xf32>
    %c0_57 = arith.constant 0 : index
    %c0_58 = arith.constant 0 : index
    %98 = vector.load %arg14[%c0_57, %c0_58] : memref<128x128xbf16, #tpu.memory_space<vmem>>, vector<128x128xbf16>
    %99 = arith.truncf %97 : vector<16x128xf32> to vector<16x128xbf16>
    %cst_59 = arith.constant dense<0.000000e+00> : vector<16x128xf32>
    %100 = tpu.matmul %99, %98, %cst_59 {dimension_numbers = #tpu.dot_dimension_numbers<[1], [0], [0], [1], [0, 0, 1, 1], [], []>} : vector<16x128xbf16>, vector<128x128xbf16>, vector<16x128xf32> -> vector<16x128xf32>
    %c0_60 = arith.constant 0 : index
    %c0_61 = arith.constant 0 : index
    %101 = vector.load %arg15[%c0_60, %c0_61] : memref<1x128xf32, #tpu.memory_space<vmem>>, vector<1x128xf32>
    %102 = vector.broadcast %101 : vector<1x128xf32> to vector<16x128xf32>
    %103 = arith.addf %100, %102 : vector<16x128xf32>
    %cst_62 = arith.constant dense<0xFF800000> : vector<16xf32>
    %104 = vector.multi_reduction <maximumf>, %103, %cst_62 [1] : vector<16x128xf32> to vector<16xf32>
    %105 = vector.shape_cast %104 : vector<16xf32> to vector<16x1xf32>
    %106 = vector.broadcast %105 : vector<16x1xf32> to vector<16x128xf32>
    %107 = arith.subf %103, %106 : vector<16x128xf32>
    %108 = math.exp %107 : vector<16x128xf32>
    %cst_63 = arith.constant dense<0.000000e+00> : vector<16xf32>
    %109 = vector.multi_reduction <add>, %108, %cst_63 [1] : vector<16x128xf32> to vector<16xf32>
    %110 = vector.shape_cast %109 : vector<16xf32> to vector<16x1xf32>
    %111 = math.log %110 : vector<16x1xf32>
    %112 = vector.broadcast %111 : vector<16x1xf32> to vector<16x128xf32>
    %113 = arith.subf %107, %112 : vector<16x128xf32>
    %c0_64 = arith.constant 0 : index
    %c0_65 = arith.constant 0 : index
    %114 = vector.load %arg16[%c0_64, %c0_65] : memref<16x128xf32, #tpu.memory_space<vmem>>, vector<16x128xf32>
    tpu.vector_store %arg16[%c0_64, %c0_65], %113 {strides = array<i32>} : memref<16x128xf32, #tpu.memory_space<vmem>>, vector<16x128xf32>,
    return
  }
  func.func @transform_0(%arg0: i32) -> (i32, i32) {
    %c0_i32 = arith.constant 0 : i32
    %c0_i32_0 = arith.constant 0 : i32
    return %arg0, %c0_i32 : i32, i32
  }
  func.func @transform_1(%arg0: i32) -> (i32, i32) {
    %c0_i32 = arith.constant 0 : i32
    %c0_i32_0 = arith.constant 0 : i32
    %c0_i32_1 = arith.constant 0 : i32
    return %c0_i32, %c0_i32_0 : i32, i32
  }
  func.func @transform_2(%arg0: i32) -> (i32, i32) {
    %c0_i32 = arith.constant 0 : i32
    %c0_i32_0 = arith.constant 0 : i32
    %c0_i32_1 = arith.constant 0 : i32
    return %c0_i32, %c0_i32_0 : i32, i32
  }
  func.func @transform_3(%arg0: i32) -> (i32, i32, i32) {
    %c0_i32 = arith.constant 0 : i32
    %c0_i32_0 = arith.constant 0 : i32
    %c0_i32_1 = arith.constant 0 : i32
    %c0_i32_2 = arith.constant 0 : i32
    return %c0_i32, %c0_i32_0, %c0_i32_1 : i32, i32, i32
  }
  func.func @transform_4(%arg0: i32) -> (i32, i32) {
    %c0_i32 = arith.constant 0 : i32
    %c0_i32_0 = arith.constant 0 : i32
    %c0_i32_1 = arith.constant 0 : i32
    return %c0_i32, %c0_i32_0 : i32, i32
  }
  func.func @transform_5(%arg0: i32) -> (i32, i32) {
    %c0_i32 = arith.constant 0 : i32
    %c0_i32_0 = arith.constant 0 : i32
    %c0_i32_1 = arith.constant 0 : i32
    return %c0_i32, %c0_i32_0 : i32, i32
  }
  func.func @transform_6(%arg0: i32) -> (i32, i32) {
    %c0_i32 = arith.constant 0 : i32
    %c0_i32_0 = arith.constant 0 : i32
    %c0_i32_1 = arith.constant 0 : i32
    return %c0_i32, %c0_i32_0 : i32, i32
  }
  func.func @transform_7(%arg0: i32) -> (i32, i32) {
    %c0_i32 = arith.constant 0 : i32
    %c0_i32_0 = arith.constant 0 : i32
    %c0_i32_1 = arith.constant 0 : i32
    return %c0_i32, %c0_i32_0 : i32, i32
  }
  func.func @transform_8(%arg0: i32) -> (i32, i32) {
    %c0_i32 = arith.constant 0 : i32
    %c0_i32_0 = arith.constant 0 : i32
    %c0_i32_1 = arith.constant 0 : i32
    return %c0_i32, %c0_i32_0 : i32, i32
  }
  func.func @transform_9(%arg0: i32) -> (i32, i32) {
    %c0_i32 = arith.constant 0 : i32
    %c0_i32_0 = arith.constant 0 : i32
    %c0_i32_1 = arith.constant 0 : i32
    return %c0_i32, %c0_i32_0 : i32, i32
  }
  func.func @transform_10(%arg0: i32) -> (i32, i32) {
    %c0_i32 = arith.constant 0 : i32
    %c0_i32_0 = arith.constant 0 : i32
    %c0_i32_1 = arith.constant 0 : i32
    return %c0_i32, %c0_i32_0 : i32, i32
  }
  func.func @transform_11(%arg0: i32) -> (i32, i32) {
    %c0_i32 = arith.constant 0 : i32
    %c0_i32_0 = arith.constant 0 : i32
    %c0_i32_1 = arith.constant 0 : i32
    return %c0_i32, %c0_i32_0 : i32, i32
  }
  func.func @transform_12(%arg0: i32) -> (i32, i32) {
    %c0_i32 = arith.constant 0 : i32
    %c0_i32_0 = arith.constant 0 : i32
    %c0_i32_1 = arith.constant 0 : i32
    return %c0_i32, %c0_i32_0 : i32, i32
  }
  func.func @transform_13(%arg0: i32) -> (i32, i32) {
    %c0_i32 = arith.constant 0 : i32
    %c0_i32_0 = arith.constant 0 : i32
    %c0_i32_1 = arith.constant 0 : i32
    return %c0_i32, %c0_i32_0 : i32, i32
  }
  func.func @transform_14(%arg0: i32) -> (i32, i32) {
    %c0_i32 = arith.constant 0 : i32
    %c0_i32_0 = arith.constant 0 : i32
    %c0_i32_1 = arith.constant 0 : i32
    return %c0_i32, %c0_i32_0 : i32, i32
  }
  func.func @transform_15(%arg0: i32) -> (i32, i32) {
    %c0_i32 = arith.constant 0 : i32
    %c0_i32_0 = arith.constant 0 : i32
    return %arg0, %c0_i32 : i32, i32
  }
}

</mosaic_0001>

<llo_original>
// kernel: tpu_custom_call.1
$region0: #{tpu_custom_call.1}
  #allocation0 [shape = 'u32[]', space=smem, size = 0x4, offset = 0x4, fixed_abs, tag = 'smem constant byte address 0x4 - core index']
  #allocation1 [shape = 'u32[72,128]{1,0:T(1,128)}', space=vmem, size = 0x9000, scoped, tag = 'internal scratch']
  %s0 = inlined_call_operand.hbm [shape: bf16[16,72], index: 0, kind: input, shape index: {}]
  %s1 = inlined_call_operand.hbm [shape: bf16[72,144], index: 1, kind: input, shape index: {}]
  %s2 = inlined_call_operand.hbm [shape: f32[1,144], index: 2, kind: input, shape index: {}]
  %s3 = inlined_call_operand.hbm [shape: bf16[3,72,72], index: 3, kind: input, shape index: {}]
  %s4 = inlined_call_operand.hbm [shape: f32[3,72], index: 4, kind: input, shape index: {}]
  %s5 = inlined_call_operand.hbm [shape: bf16[72,288], index: 5, kind: input, shape index: {}]
  %s6 = inlined_call_operand.vmem [shape: f32[1,288], index: 6, kind: input, shape index: {}]
  %s7 = inlined_call_operand.hbm [shape: bf16[144,144], index: 7, kind: input, shape index: {}]
  %s8 = inlined_call_operand.hbm [shape: f32[1,144], index: 8, kind: input, shape index: {}]
  %s9 = inlined_call_operand.hbm [shape: bf16[144,288], index: 9, kind: input, shape index: {}]
  %s10 = inlined_call_operand.vmem [shape: f32[1,288], index: 10, kind: input, shape index: {}]
  %s11 = inlined_call_operand.hbm [shape: bf16[288,128], index: 11, kind: input, shape index: {}]
  %s12 = inlined_call_operand.vmem [shape: f32[1,128], index: 12, kind: input, shape index: {}]
  %s13 = inlined_call_operand.hbm [shape: bf16[128,128], index: 13, kind: input, shape index: {}]
  %s14 = inlined_call_operand.vmem [shape: f32[1,128], index: 14, kind: input, shape index: {}]
  %s15 = inlined_call_operand.hbm [shape: f32[16,128], index: 15, kind: output, shape index: {}]
  %s16 = sld [smem:[#allocation0]]
  $region114: #{tpu_custom_call.1} parent=0
    _
  %s18 = ssub.s32 1, %s16
  %s19 = scalar_select 0, %s18, %s16
  $region1: #{tpu_custom_call.1} parent=0
    #allocation2 [shape = 'u8[4096]{0}', space=vmem, size = 0x1000, scoped, tag = 'input window, operand 0, single buffered']
    #allocation3 [shape = 's32[1]{0}', space=sflag, size = 0x4, scoped, tag = 'scoped memory for tpu_custom_call.1']
    #allocation4 [shape = 's32[1]{0}', space=sflag, size = 0x4, scoped, tag = 'scoped memory for tpu_custom_call.1']
    #allocation5 [shape = 'u8[36864]{0}', space=vmem, size = 0x9000, scoped, tag = 'input window, operand 1, single buffered']
    #allocation6 [shape = 's32[1]{0}', space=sflag, size = 0x4, scoped, tag = 'scoped memory for tpu_custom_call.1']
    #allocation7 [shape = 'u8[1024]{0}', space=vmem, size = 0x400, scoped, tag = 'input window, operand 2, single buffered']
    #allocation8 [shape = 'u8[55296]{0}', space=vmem, size = 0xd800, scoped, tag = 'input window, operand 3, single buffered']
    #allocation9 [shape = 's32[1]{0}', space=sflag, size = 0x4, scoped, tag = 'scoped memory for tpu_custom_call.1']
    #allocation10 [shape = 'u8[2048]{0}', space=vmem, size = 0x800, scoped, tag = 'input window, operand 4, single buffered']
    #allocation11 [shape = 'u8[55296]{0}', space=vmem, size = 0xd800, scoped, tag = 'input window, operand 5, single buffered']
    #allocation12 [shape = 's32[1]{0}', space=sflag, size = 0x4, scoped, tag = 'scoped memory for tpu_custom_call.1']
    #allocation13 [shape = 'u8[73728]{0}', space=vmem, size = 0x12000, scoped, tag = 'input window, operand 7, single buffered']
    #allocation14 [shape = 'u8[1024]{0}', space=vmem, size = 0x400, scoped, tag = 'input window, operand 8, single buffered']
    #allocation15 [shape = 's32[1]{0}', space=sflag, size = 0x4, scoped, tag = 'scoped memory for tpu_custom_call.1']
    #allocation16 [shape = 'u8[110592]{0}', space=vmem, size = 0x1b000, scoped, tag = 'input window, operand 9, single buffered']
    #allocation17 [shape = 'u8[73728]{0}', space=vmem, size = 0x12000, scoped, tag = 'input window, operand 11, single buffered']
    #allocation18 [shape = 's32[1]{0}', space=sflag, size = 0x4, scoped, tag = 'scoped memory for tpu_custom_call.1']
    #allocation19 [shape = 'u8[32768]{0}', space=vmem, size = 0x8000, scoped, tag = 'input window, operand 13, single buffered']
    #allocation20 [shape = 'u8[8192]{0}', space=vmem, size = 0x2000, scoped, tag = 'output window, operand 0, single buffered']
    %20 = vsyncpa [#allocation3], 0
    %21 = vsyncpa [#allocation6], 0
    %22 = vsyncpa [#allocation9], 0
    %23 = vsyncpa [#allocation12], 0
    %24 = vsyncpa [#allocation15], 0
    %25 = vsyncpa [#allocation18], 0
    %26 = vsyncpa [#allocation4], 0
    // Predicated region
    $region2: #{tpu_custom_call.1} parent=1 // pred_check
      _
    $region3: #{tpu_custom_call.1} parent=1 // pred_check_branch
      %28 = sbr.rel (0) target = $region5
    $region4: #{tpu_custom_call.1} parent=1 // pred_region
      %30 = vsyncadd [#allocation3], 0
      %s31 = sshll.u32 %s0, 4
      %s32 = int_to_ptr.hbm [resolvable:$true] %s31
      %s33 = sshll.u32 [#allocation2], 4
      %s34 = int_to_ptr.vmem [resolvable:$true] %s33
      %39 = dma.hbm_to_vmem [thread:$0]  %s32, 128, %s34, [#allocation3], 64, 64, 4
    $region5: #{tpu_custom_call.1} parent=1 // pred_fallthru
      _
    // Predicated region
    $region6: #{tpu_custom_call.1} parent=1 // pred_check
      _
    $region7: #{tpu_custom_call.1} parent=1 // pred_check_branch
      %41 = sbr.rel (0) target = $region9
    $region8: #{tpu_custom_call.1} parent=1 // pred_region
      %43 = vsyncadd [#allocation6], 0
      %s44 = sshll.u32 %s1, 4
      %s45 = int_to_ptr.hbm [resolvable:$true] %s44
      %s46 = sshll.u32 [#allocation5], 4
      %s47 = int_to_ptr.vmem [resolvable:$true] %s46
      %52 = dma.hbm_to_vmem [thread:$0]  %s45, 1152, %s47, [#allocation6], 128, 128, 8
    $region9: #{tpu_custom_call.1} parent=1 // pred_fallthru
      _
    // Predicated region
    $region10: #{tpu_custom_call.1} parent=1 // pred_check
      _
    $region11: #{tpu_custom_call.1} parent=1 // pred_check_branch
      %54 = sbr.rel (0) target = $region13
    $region12: #{tpu_custom_call.1} parent=1 // pred_region
      %56 = vsyncadd [#allocation6], 0
      %s58 = sshll.u32 %s2, 4
      %s59 = int_to_ptr.hbm [resolvable:$true] %s58
      %s60 = sshll.u32 [#allocation7], 4
      %s61 = int_to_ptr.vmem [resolvable:$true] %s60
      %63 = dma.hbm_to_vmem [thread:$0]  %s59, 32, %s61, [#allocation6]
    $region13: #{tpu_custom_call.1} parent=1 // pred_fallthru
      _
    // Predicated region
    $region14: #{tpu_custom_call.1} parent=1 // pred_check
      _
    $region15: #{tpu_custom_call.1} parent=1 // pred_check_branch
      %65 = sbr.rel (0) target = $region17
    $region16: #{tpu_custom_call.1} parent=1 // pred_region
      %67 = vsyncadd [#allocation9], 0
      %s68 = sshll.u32 %s3, 4
      %s69 = int_to_ptr.hbm [resolvable:$true] %s68
      %s70 = sshll.u32 [#allocation8], 4
      %s71 = int_to_ptr.vmem [resolvable:$true] %s70
      %76 = dma.hbm_to_vmem [thread:$0]  %s69, 1728, %s71, [#allocation9], 64, 64, 4
    $region17: #{tpu_custom_call.1} parent=1 // pred_fallthru
      _
    // Predicated region
    $region18: #{tpu_custom_call.1} parent=1 // pred_check
      _
    $region19: #{tpu_custom_call.1} parent=1 // pred_check_branch
      %78 = sbr.rel (0) target = $region21
    $region20: #{tpu_custom_call.1} parent=1 // pred_region
      %80 = vsyncadd [#allocation9], 0
      %s82 = sshll.u32 %s4, 4
      %s83 = int_to_ptr.hbm [resolvable:$true] %s82
      %s84 = sshll.u32 [#allocation10], 4
      %s85 = int_to_ptr.vmem [resolvable:$true] %s84
      %87 = dma.hbm_to_vmem [thread:$0]  %s83, 64, %s85, [#allocation9]
    $region21: #{tpu_custom_call.1} parent=1 // pred_fallthru
      _
    // Predicated region
    $region22: #{tpu_custom_call.1} parent=1 // pred_check
      _
    $region23: #{tpu_custom_call.1} parent=1 // pred_check_branch
      %89 = sbr.rel (0) target = $region25
    $region24: #{tpu_custom_call.1} parent=1 // pred_region
      %91 = vsyncadd [#allocation12], 0
      %s92 = sshll.u32 %s5, 4
      %s93 = int_to_ptr.hbm [resolvable:$true] %s92
      %s94 = sshll.u32 [#allocation11], 4
      %s95 = int_to_ptr.vmem [resolvable:$true] %s94
      %100 = dma.hbm_to_vmem [thread:$0]  %s93, 1728, %s95, [#allocation12], 192, 192, 12
    $region25: #{tpu_custom_call.1} parent=1 // pred_fallthru
      _
    // Predicated region
    $region26: #{tpu_custom_call.1} parent=1 // pred_check
      _
    $region27: #{tpu_custom_call.1} parent=1 // pred_check_branch
      %102 = sbr.rel (0) target = $region29
    $region28: #{tpu_custom_call.1} parent=1 // pred_region
      _
    $region29: #{tpu_custom_call.1} parent=1 // pred_fallthru
      _
    // Predicated region
    $region30: #{tpu_custom_call.1} parent=1 // pred_check
      _
    $region31: #{tpu_custom_call.1} parent=1 // pred_check_branch
      %104 = sbr.rel (0) target = $region33
    $region32: #{tpu_custom_call.1} parent=1 // pred_region
      %106 = vsyncadd [#allocation12], 0
      %s107 = sshll.u32 %s7, 4
      %s108 = int_to_ptr.hbm [resolvable:$true] %s107
      %s109 = sshll.u32 [#allocation13], 4
      %s110 = int_to_ptr.vmem [resolvable:$true] %s109
      %115 = dma.hbm_to_vmem [thread:$0]  %s108, 2304, %s110, [#allocation12], 128, 128, 8
    $region33: #{tpu_custom_call.1} parent=1 // pred_fallthru
      _
    // Predicated region
    $region34: #{tpu_custom_call.1} parent=1 // pred_check
      _
    $region35: #{tpu_custom_call.1} parent=1 // pred_check_branch
      %117 = sbr.rel (0) target = $region37
    $region36: #{tpu_custom_call.1} parent=1 // pred_region
      %119 = vsyncadd [#allocation15], 0
      %s121 = sshll.u32 %s8, 4
      %s122 = int_to_ptr.hbm [resolvable:$true] %s121
      %s123 = sshll.u32 [#allocation14], 4
      %s124 = int_to_ptr.vmem [resolvable:$true] %s123
      %126 = dma.hbm_to_vmem [thread:$0]  %s122, 32, %s124, [#allocation15]
    $region37: #{tpu_custom_call.1} parent=1 // pred_fallthru
      _
    // Predicated region
    $region38: #{tpu_custom_call.1} parent=1 // pred_check
      _
    $region39: #{tpu_custom_call.1} parent=1 // pred_check_branch
      %128 = sbr.rel (0) target = $region41
    $region40: #{tpu_custom_call.1} parent=1 // pred_region
      %130 = vsyncadd [#allocation15], 0
      %s131 = sshll.u32 %s9, 4
      %s132 = int_to_ptr.hbm [resolvable:$true] %s131
      %s133 = sshll.u32 [#allocation16], 4
      %s134 = int_to_ptr.vmem [resolvable:$true] %s133
      %139 = dma.hbm_to_vmem [thread:$0]  %s132, 3456, %s134, [#allocation15], 192, 192, 12
    $region41: #{tpu_custom_call.1} parent=1 // pred_fallthru
      _
    // Predicated region
    $region42: #{tpu_custom_call.1} parent=1 // pred_check
      _
    $region43: #{tpu_custom_call.1} parent=1 // pred_check_branch
      %141 = sbr.rel (0) target = $region45
    $region44: #{tpu_custom_call.1} parent=1 // pred_region
      _
    $region45: #{tpu_custom_call.1} parent=1 // pred_fallthru
      _
    // Predicated region
    $region46: #{tpu_custom_call.1} parent=1 // pred_check
      _
    $region47: #{tpu_custom_call.1} parent=1 // pred_check_branch
      %143 = sbr.rel (0) target = $region49
    $region48: #{tpu_custom_call.1} parent=1 // pred_region
      %145 = vsyncadd [#allocation18], 0
      %s146 = sshll.u32 %s11, 4
      %s147 = int_to_ptr.hbm [resolvable:$true] %s146
      %s148 = sshll.u32 [#allocation17], 4
      %s149 = int_to_ptr.vmem [resolvable:$true] %s148
      %154 = dma.hbm_to_vmem [thread:$0]  %s147, 2304, %s149, [#allocation18], 64, 64, 4
    $region49: #{tpu_custom_call.1} parent=1 // pred_fallthru
      _
    // Predicated region
    $region50: #{tpu_custom_call.1} parent=1 // pred_check
      _
    $region51: #{tpu_custom_call.1} parent=1 // pred_check_branch
      %156 = sbr.rel (0) target = $region53
    $region52: #{tpu_custom_call.1} parent=1 // pred_region
      _
    $region53: #{tpu_custom_call.1} parent=1 // pred_fallthru
      _
    // Predicated region
    $region54: #{tpu_custom_call.1} parent=1 // pred_check
      _
    $region55: #{tpu_custom_call.1} parent=1 // pred_check_branch
      %158 = sbr.rel (0) target = $region57
    $region56: #{tpu_custom_call.1} parent=1 // pred_region
      %160 = vsyncadd [#allocation18], 0
      %s161 = sshll.u32 %s13, 4
      %s162 = int_to_ptr.hbm [resolvable:$true] %s161
      %s163 = sshll.u32 [#allocation19], 4
      %s164 = int_to_ptr.vmem [resolvable:$true] %s163
      %169 = dma.hbm_to_vmem [thread:$0]  %s162, 1024, %s164, [#allocation18], 64, 64, 4
    $region57: #{tpu_custom_call.1} parent=1 // pred_fallthru
      _
    // Predicated region
    $region58: #{tpu_custom_call.1} parent=1 // pred_check
      _
    $region59: #{tpu_custom_call.1} parent=1 // pred_check_branch
      %171 = sbr.rel (0) target = $region61
    $region60: #{tpu_custom_call.1} parent=1 // pred_region
      _
    $region61: #{tpu_custom_call.1} parent=1 // pred_fallthru
      _
    // Predicated region
    $region62: #{tpu_custom_call.1} parent=1 // pred_check
      _
    $region63: #{tpu_custom_call.1} parent=1 // pred_check_branch
      %173 = sbr.rel (0) target = $region65
    $region64: #{tpu_custom_call.1} parent=1 // pred_region
      %175 = dma.done [#allocation3], 128
    $region65: #{tpu_custom_call.1} parent=1 // pred_fallthru
      _
    // Predicated region
    $region66: #{tpu_custom_call.1} parent=1 // pred_check
      _
    $region67: #{tpu_custom_call.1} parent=1 // pred_check_branch
      %177 = sbr.rel (0) target = $region69
    $region68: #{tpu_custom_call.1} parent=1 // pred_region
      %179 = dma.done [#allocation6], 1152
    $region69: #{tpu_custom_call.1} parent=1 // pred_fallthru
      _
    // Predicated region
    $region70: #{tpu_custom_call.1} parent=1 // pred_check
      _
    $region71: #{tpu_custom_call.1} parent=1 // pred_check_branch
      %181 = sbr.rel (0) target = $region73
    $region72: #{tpu_custom_call.1} parent=1 // pred_region
      %183 = dma.done [#allocation6], 32
    $region73: #{tpu_custom_call.1} parent=1 // pred_fallthru
      _
    // Predicated region
    $region74: #{tpu_custom_call.1} parent=1 // pred_check
      _
    $region75: #{tpu_custom_call.1} parent=1 // pred_check_branch
      %185 = sbr.rel (0) target = $region77
    $region76: #{tpu_custom_call.1} parent=1 // pred_region
      %187 = dma.done [#allocation9], 1728
    $region77: #{tpu_custom_call.1} parent=1 // pred_fallthru
      _
    // Predicated region
    $region78: #{tpu_custom_call.1} parent=1 // pred_check
      _
    $region79: #{tpu_custom_call.1} parent=1 // pred_check_branch
      %189 = sbr.rel (0) target = $region81
    $region80: #{tpu_custom_call.1} parent=1 // pred_region
      %191 = dma.done [#allocation9], 64
    $region81: #{tpu_custom_call.1} parent=1 // pred_fallthru
      _
    // Predicated region
    $region82: #{tpu_custom_call.1} parent=1 // pred_check
      _
    $region83: #{tpu_custom_call.1} parent=1 // pred_check_branch
      %193 = sbr.rel (0) target = $region85
    $region84: #{tpu_custom_call.1} parent=1 // pred_region
      %195 = dma.done [#allocation12], 1728
    $region85: #{tpu_custom_call.1} parent=1 // pred_fallthru
      _
    // Predicated region
    $region86: #{tpu_custom_call.1} parent=1 // pred_check
      _
    $region87: #{tpu_custom_call.1} parent=1 // pred_check_branch
      %197 = sbr.rel (0) target = $region89
    $region88: #{tpu_custom_call.1} parent=1 // pred_region
      %199 = dma.done [#allocation12], 2304
    $region89: #{tpu_custom_call.1} parent=1 // pred_fallthru
      _
    // Predicated region
    $region90: #{tpu_custom_call.1} parent=1 // pred_check
      _
    $region91: #{tpu_custom_call.1} parent=1 // pred_check_branch
      %201 = sbr.rel (0) target = $region93
    $region92: #{tpu_custom_call.1} parent=1 // pred_region
      %203 = dma.done [#allocation15], 32
    $region93: #{tpu_custom_call.1} parent=1 // pred_fallthru
      _
    // Predicated region
    $region94: #{tpu_custom_call.1} parent=1 // pred_check
      _
    $region95: #{tpu_custom_call.1} parent=1 // pred_check_branch
      %205 = sbr.rel (0) target = $region97
    $region96: #{tpu_custom_call.1} parent=1 // pred_region
      %207 = dma.done [#allocation15], 3456
    $region97: #{tpu_custom_call.1} parent=1 // pred_fallthru
      _
    // Predicated region
    $region98: #{tpu_custom_call.1} parent=1 // pred_check
      _
    $region99: #{tpu_custom_call.1} parent=1 // pred_check_branch
      %209 = sbr.rel (0) target = $region101
    $region100: #{tpu_custom_call.1} parent=1 // pred_region
      %211 = dma.done [#allocation18], 2304
    $region101: #{tpu_custom_call.1} parent=1 // pred_fallthru
      _
    // Predicated region
    $region102: #{tpu_custom_call.1} parent=1 // pred_check
      _
    $region103: #{tpu_custom_call.1} parent=1 // pred_check_branch
      %213 = sbr.rel (0) target = $region105
    $region104: #{tpu_custom_call.1} parent=1 // pred_region
      %215 = dma.done [#allocation18], 1024
    $region105: #{tpu_custom_call.1} parent=1 // pred_fallthru
      _
    %v217 = vld [vmem:[#allocation2] sm:$0xf]
    %v218 = vld [vmem:[#allocation2 + $0x4] sm:$0xf]
    %v219 = vld [vmem:[#allocation5] sm:$0xff]
    %v220 = vld [vmem:[#allocation5 + $0x8] sm:$0xff]
    %v221 = vld [vmem:[#allocation5 + $0x10] sm:$0xff]
    %v222 = vld [vmem:[#allocation5 + $0x18] sm:$0xff]
    %v223 = vld [vmem:[#allocation5 + $0x20] sm:$0xff]
    %v224 = vld [vmem:[#allocation5 + $0x28] sm:$0xff]
    %v225 = vld [vmem:[#allocation5 + $0x30] sm:$0xff]
    %v226 = vld [vmem:[#allocation5 + $0x38] sm:$0xff]
    %v227 = vld [vmem:[#allocation5 + $0x40] sm:$0xff]
    %v228 = vld [vmem:[#allocation7] sm:$0x3]
    %v230 = vperm.slane %v228, 0
    %v231 = vperm.slane %v228, 1
    %v236 = vunpack.c.l.b16 %v217
    %v237 = vunpack.c.l.b16 %v218
    %v238 = vpack.c.b16 %v237, %v236
    %v248 = vunpack.c.l.b16 %v219
    %v249 = vunpack.c.h.b16 %v219
    %v250 = vunpack.c.l.b16 %v220
    %v251 = vunpack.c.h.b16 %v220
    %v252 = vunpack.c.l.b16 %v221
    %v253 = vunpack.c.h.b16 %v221
    %v254 = vunpack.c.l.b16 %v222
    %v255 = vunpack.c.h.b16 %v222
    %v256 = vunpack.c.l.b16 %v223
    %v257 = vunpack.c.h.b16 %v223
    %v258 = vunpack.c.l.b16 %v224
    %v259 = vunpack.c.h.b16 %v224
    %v260 = vunpack.c.l.b16 %v225
    %v261 = vunpack.c.h.b16 %v225
    %v262 = vunpack.c.l.b16 %v226
    %v263 = vunpack.c.h.b16 %v226
    %v264 = vunpack.c.l.b16 %v227
    %v265 = vunpack.c.h.b16 %v227
    %v266 = vpack.c.b16 %v250, %v248
    %v267 = vpack.c.b16 %v251, %v249
    %v268 = vpack.c.b16 %v254, %v252
    %v269 = vpack.c.b16 %v255, %v253
    %v270 = vpack.c.b16 %v258, %v256
    %v271 = vpack.c.b16 %v259, %v257
    %v272 = vpack.c.b16 %v262, %v260
    %v273 = vpack.c.b16 %v263, %v261
    %v274 = vpack.c.b16 %v264, %v264
    %v275 = vpack.c.b16 %v265, %v265
    %vm284 = vcmask 588800
    %v286 = vsel %vm284, %v238, 0
    %vm288 = vcmask 1043456
    %v290 = vsel %vm288, %v274, 0
    %v293 = vsel %vm288, %v275, 0
    %295 = vmatpush.bf16.msra.mxu0 0
    %296 = vmatpush.bf16.msra.mxu0 0
    %297 = vmatpush.bf16.msra.mxu0 0
    %298 = vmatpush.bf16.msra.mxu0 %v290
    %299 = vmatpush.bf16.msra.mxu0 %v272
    %300 = vmatpush.bf16.msra.mxu0 %v270
    %301 = vmatpush.bf16.msra.mxu0 %v268
    %302 = vmatpush.bf16.msra.mxu0 %v266
    %303 = vmatmul.bf16.gmra.mxu0 %v286
    %v304 = vpop.f32.mrf.mxu0
    %v305 = vadd.f32 %v230, %v304
    %v306 = vpop.f32.mrf.mxu0
    %v307 = vadd.f32 %v230, %v306
    %308 = vdwg.mxu0
    %309 = vmatpush.bf16.msra.mxu0 0
    %310 = vmatpush.bf16.msra.mxu0 0
    %311 = vmatpush.bf16.msra.mxu0 0
    %312 = vmatpush.bf16.msra.mxu0 %v293
    %313 = vmatpush.bf16.msra.mxu0 %v273
    %314 = vmatpush.bf16.msra.mxu0 %v271
    %315 = vmatpush.bf16.msra.mxu0 %v269
    %316 = vmatpush.bf16.msra.mxu0 %v267
    %317 = vmatmul.bf16.gmra.mxu0 %v286
    %v318 = vpop.f32.mrf.mxu0
    %v319 = vadd.f32 %v231, %v318
    %v320 = vpop.f32.mrf.mxu0
    %v321 = vadd.f32 %v231, %v320
    %322 = vdwg.mxu0
    %vm323 = vcmp.gt.f32.partialorder %v305, 0.0
    %vm324 = vcmp.gt.f32.partialorder %v307, 0.0
    %v325 = vmul.f32 %v305, 0.01
    %v326 = vmul.f32 %v307, 0.01
    %v327 = vsel %vm323, %v305, %v325
    %v328 = vsel %vm324, %v307, %v326
    %v329 = vld [vmem:[#allocation8] sm:$0xf]
    %v330 = vld [vmem:[#allocation8 + $0x4] sm:$0xf]
    %v331 = vld [vmem:[#allocation8 + $0x8] sm:$0xf]
    %v332 = vld [vmem:[#allocation8 + $0xc] sm:$0xf]
    %v333 = vld [vmem:[#allocation8 + $0x10] sm:$0xf]
    %v334 = vld [vmem:[#allocation8 + $0x14] sm:$0xf]
    %v335 = vld [vmem:[#allocation8 + $0x18] sm:$0xf]
    %v336 = vld [vmem:[#allocation8 + $0x1c] sm:$0xf]
    %v337 = vld [vmem:[#allocation8 + $0x20] sm:$0xf]
    %v338 = vpack.c.bf16 %v328, %v327
    %v339 = vld [vmem:[#allocation10] sm:$0x1]
    %v340 = vperm.slane %v339, 0
    %v350 = vunpack.c.l.b16 %v329
    %v351 = vunpack.c.l.b16 %v330
    %v352 = vunpack.c.l.b16 %v331
    %v353 = vunpack.c.l.b16 %v332
    %v354 = vunpack.c.l.b16 %v333
    %v355 = vunpack.c.l.b16 %v334
    %v356 = vunpack.c.l.b16 %v335
    %v357 = vunpack.c.l.b16 %v336
    %v358 = vunpack.c.l.b16 %v337
    %v359 = vpack.c.b16 %v351, %v350
    %v360 = vpack.c.b16 %v353, %v352
    %v361 = vpack.c.b16 %v355, %v354
    %v362 = vpack.c.b16 %v357, %v356
    %v363 = vpack.c.b16 %v358, %v358
    %v369 = vsel %vm284, %v338, 0
    %v372 = vsel %vm288, %v363, 0
    %374 = vmatpush.bf16.msra.mxu0 0
    %375 = vmatpush.bf16.msra.mxu0 0
    %376 = vmatpush.bf16.msra.mxu0 0
    %377 = vmatpush.bf16.msra.mxu0 %v372
    %378 = vmatpush.bf16.msra.mxu0 %v362
    %379 = vmatpush.bf16.msra.mxu0 %v361
    %380 = vmatpush.bf16.msra.mxu0 %v360
    %381 = vmatpush.bf16.msra.mxu0 %v359
    %382 = vmatmul.bf16.gmra.mxu0 %v369
    %v383 = vpop.f32.mrf.mxu0
    %v384 = vadd.f32 %v340, %v383
    %v385 = vpop.f32.mrf.mxu0
    %v386 = vadd.f32 %v340, %v385
    %387 = vdwg.mxu0
    %vm388 = vcmp.gt.f32.partialorder %v384, 0.0
    %vm389 = vcmp.gt.f32.partialorder %v386, 0.0
    %v390 = vmul.f32 %v384, 0.01
    %v391 = vmul.f32 %v386, 0.01
    %v392 = vsel %vm388, %v384, %v390
    %v393 = vsel %vm389, %v386, %v391
    %398 = vrot.lane.b32.xlu0 %v305, 56
    %v399 = vpop.permute.xlu0 %398
    %400 = vrot.lane.b32.xlu0 %v319, 56
    %v401 = vpop.permute.xlu0 %400
    %402 = vrot.lane.b32.xlu0 %v307, 56
    %v403 = vpop.permute.xlu0 %402
    %404 = vrot.lane.b32.xlu0 %v321, 56
    %v405 = vpop.permute.xlu0 %404
    %vm406 = vcmask 457728
    %v407 = vsel %vm406, %v399, %v401
    %v408 = vsel %vm406, %v403, %v405
    %v411 = vadd.f32 %v392, %v407
    %v412 = vadd.f32 %v393, %v408
    %s413 = scalar_lea.vmem [#allocation8], 36
    %v414 = vld [vmem:[%s413] sm:$0xf]
    %v415 = vld [vmem:[%s413 + $0x4] sm:$0xf]
    %v416 = vld [vmem:[%s413 + $0x8] sm:$0xf]
    %v417 = vld [vmem:[%s413 + $0xc] sm:$0xf]
    %v418 = vld [vmem:[%s413 + $0x10] sm:$0xf]
    %v419 = vld [vmem:[%s413 + $0x14] sm:$0xf]
    %v420 = vld [vmem:[%s413 + $0x18] sm:$0xf]
    %v421 = vld [vmem:[%s413 + $0x1c] sm:$0xf]
    %v422 = vld [vmem:[%s413 + $0x20] sm:$0xf]
    %v423 = vpack.c.bf16 %v412, %v411
    %v424 = vld [vmem:[#allocation10 + $0x1] sm:$0x1]
    %v425 = vperm.slane %v424, 0
    %v435 = vunpack.c.l.b16 %v414
    %v436 = vunpack.c.l.b16 %v415
    %v437 = vunpack.c.l.b16 %v416
    %v438 = vunpack.c.l.b16 %v417
    %v439 = vunpack.c.l.b16 %v418
    %v440 = vunpack.c.l.b16 %v419
    %v441 = vunpack.c.l.b16 %v420
    %v442 = vunpack.c.l.b16 %v421
    %v443 = vunpack.c.l.b16 %v422
    %v444 = vpack.c.b16 %v436, %v435
    %v445 = vpack.c.b16 %v438, %v437
    %v446 = vpack.c.b16 %v440, %v439
    %v447 = vpack.c.b16 %v442, %v441
    %v448 = vpack.c.b16 %v443, %v443
    %v454 = vsel %vm284, %v423, 0
    %v457 = vsel %vm288, %v448, 0
    %459 = vmatpush.bf16.msra.mxu0 0
    %460 = vmatpush.bf16.msra.mxu0 0
    %461 = vmatpush.bf16.msra.mxu0 0
    %462 = vmatpush.bf16.msra.mxu0 %v457
    %463 = vmatpush.bf16.msra.mxu0 %v447
    %464 = vmatpush.bf16.msra.mxu0 %v446
    %465 = vmatpush.bf16.msra.mxu0 %v445
    %466 = vmatpush.bf16.msra.mxu0 %v444
    %467 = vmatmul.bf16.gmra.mxu0 %v454
    %v468 = vpop.f32.mrf.mxu0
    %v469 = vadd.f32 %v425, %v468
    %v470 = vpop.f32.mrf.mxu0
    %v471 = vadd.f32 %v425, %v470
    %472 = vdwg.mxu0
    %vm473 = vcmp.gt.f32.partialorder %v469, 0.0
    %vm474 = vcmp.gt.f32.partialorder %v471, 0.0
    %v475 = vmul.f32 %v469, 0.01
    %v476 = vmul.f32 %v471, 0.01
    %v477 = vsel %vm473, %v469, %v475
    %v478 = vsel %vm474, %v471, %v476
    %s479 = scalar_lea.vmem [#allocation8], 72
    %v480 = vld [vmem:[%s479] sm:$0xf]
    %v481 = vld [vmem:[%s479 + $0x4] sm:$0xf]
    %v482 = vld [vmem:[%s479 + $0x8] sm:$0xf]
    %v483 = vld [vmem:[%s479 + $0xc] sm:$0xf]
    %v484 = vld [vmem:[%s479 + $0x10] sm:$0xf]
    %v485 = vld [vmem:[%s479 + $0x14] sm:$0xf]
    %v486 = vld [vmem:[%s479 + $0x18] sm:$0xf]
    %v487 = vld [vmem:[%s479 + $0x1c] sm:$0xf]
    %v488 = vld [vmem:[%s479 + $0x20] sm:$0xf]
    %v489 = vpack.c.bf16 %v478, %v477
    %v490 = vld [vmem:[#allocation10 + $0x2] sm:$0x1]
    %v491 = vperm.slane %v490, 0
    %v501 = vunpack.c.l.b16 %v480
    %v502 = vunpack.c.l.b16 %v481
    %v503 = vunpack.c.l.b16 %v482
    %v504 = vunpack.c.l.b16 %v483
    %v505 = vunpack.c.l.b16 %v484
    %v506 = vunpack.c.l.b16 %v485
    %v507 = vunpack.c.l.b16 %v486
    %v508 = vunpack.c.l.b16 %v487
    %v509 = vunpack.c.l.b16 %v488
    %v510 = vpack.c.b16 %v502, %v501
    %v511 = vpack.c.b16 %v504, %v503
    %v512 = vpack.c.b16 %v506, %v505
    %v513 = vpack.c.b16 %v508, %v507
    %v514 = vpack.c.b16 %v509, %v509
    %v520 = vsel %vm284, %v489, 0
    %v523 = vsel %vm288, %v514, 0
    %525 = vmatpush.bf16.msra.mxu0 0
    %526 = vmatpush.bf16.msra.mxu0 0
    %527 = vmatpush.bf16.msra.mxu0 0
    %528 = vmatpush.bf16.msra.mxu0 %v523
    %529 = vmatpush.bf16.msra.mxu0 %v513
    %530 = vmatpush.bf16.msra.mxu0 %v512
    %531 = vmatpush.bf16.msra.mxu0 %v511
    %532 = vmatpush.bf16.msra.mxu0 %v510
    %533 = vmatmul.bf16.gmra.mxu0 %v520
    %v534 = vpop.f32.mrf.mxu0
    %v535 = vadd.f32 %v491, %v534
    %v536 = vpop.f32.mrf.mxu0
    %v537 = vadd.f32 %v491, %v536
    %538 = vdwg.mxu0
    %vm539 = vcmp.gt.f32.partialorder %v535, 0.0
    %vm540 = vcmp.gt.f32.partialorder %v537, 0.0
    %v541 = vmul.f32 %v535, 0.01
    %v542 = vmul.f32 %v537, 0.01
    %v543 = vsel %vm539, %v535, %v541
    %v544 = vsel %vm540, %v537, %v542
    %v545 = vadd.f32 %v543, %v411
    %v546 = vadd.f32 %v544, %v412
    %v547 = vld [vmem:[#allocation11] sm:$0xff]
    %v548 = vld [vmem:[#allocation11 + $0x8] sm:$0xf]
    %v549 = vld [vmem:[#allocation11 + $0xc] sm:$0xff]
    %v550 = vld [vmem:[#allocation11 + $0x14] sm:$0xf]
    %v551 = vld [vmem:[#allocation11 + $0x18] sm:$0xff]
    %v552 = vld [vmem:[#allocation11 + $0x20] sm:$0xf]
    %v553 = vld [vmem:[#allocation11 + $0x24] sm:$0xff]
    %v554 = vld [vmem:[#allocation11 + $0x2c] sm:$0xf]
    %v555 = vld [vmem:[#allocation11 + $0x30] sm:$0xff]
    %v556 = vld [vmem:[#allocation11 + $0x38] sm:$0xf]
    %v557 = vld [vmem:[#allocation11 + $0x3c] sm:$0xff]
    %v558 = vld [vmem:[#allocation11 + $0x44] sm:$0xf]
    %v559 = vld [vmem:[#allocation11 + $0x48] sm:$0xff]
    %v560 = vld [vmem:[#allocation11 + $0x50] sm:$0xf]
    %v561 = vld [vmem:[#allocation11 + $0x54] sm:$0xff]
    %v562 = vld [vmem:[#allocation11 + $0x5c] sm:$0xf]
    %v563 = vld [vmem:[#allocation11 + $0x60] sm:$0xff]
    %v564 = vld [vmem:[#allocation11 + $0x68] sm:$0xf]
    %v565 = vpack.c.bf16 %v546, %v545
    %v566 = vld [vmem:[%s6] sm:$0x7]
    %v568 = vperm.slane %v566, 0
    %v569 = vperm.slane %v566, 1
    %v570 = vperm.slane %v566, 2
    %v592 = vunpack.c.l.b16 %v547
    %v593 = vunpack.c.h.b16 %v547
    %v594 = vunpack.c.l.b16 %v548
    %v595 = vunpack.c.l.b16 %v549
    %v596 = vunpack.c.h.b16 %v549
    %v597 = vunpack.c.l.b16 %v550
    %v598 = vunpack.c.l.b16 %v551
    %v599 = vunpack.c.h.b16 %v551
    %v600 = vunpack.c.l.b16 %v552
    %v601 = vunpack.c.l.b16 %v553
    %v602 = vunpack.c.h.b16 %v553
    %v603 = vunpack.c.l.b16 %v554
    %v604 = vunpack.c.l.b16 %v555
    %v605 = vunpack.c.h.b16 %v555
    %v606 = vunpack.c.l.b16 %v556
    %v607 = vunpack.c.l.b16 %v557
    %v608 = vunpack.c.h.b16 %v557
    %v609 = vunpack.c.l.b16 %v558
    %v610 = vunpack.c.l.b16 %v559
    %v611 = vunpack.c.h.b16 %v559
    %v612 = vunpack.c.l.b16 %v560
    %v613 = vunpack.c.l.b16 %v561
    %v614 = vunpack.c.h.b16 %v561
    %v615 = vunpack.c.l.b16 %v562
    %v616 = vunpack.c.l.b16 %v563
    %v617 = vunpack.c.h.b16 %v563
    %v618 = vunpack.c.l.b16 %v564
    %v619 = vpack.c.b16 %v595, %v592
    %v620 = vpack.c.b16 %v596, %v593
    %v621 = vpack.c.b16 %v597, %v594
    %v622 = vpack.c.b16 %v601, %v598
    %v623 = vpack.c.b16 %v602, %v599
    %v624 = vpack.c.b16 %v603, %v600
    %v625 = vpack.c.b16 %v607, %v604
    %v626 = vpack.c.b16 %v608, %v605
    %v627 = vpack.c.b16 %v609, %v606
    %v628 = vpack.c.b16 %v613, %v610
    %v629 = vpack.c.b16 %v614, %v611
    %v630 = vpack.c.b16 %v615, %v612
    %v631 = vpack.c.b16 %v616, %v616
    %v632 = vpack.c.b16 %v617, %v617
    %v633 = vpack.c.b16 %v618, %v618
    %v647 = vsel %vm284, %v565, 0
    %v650 = vsel %vm288, %v631, 0
    %v653 = vsel %vm288, %v632, 0
    %v656 = vsel %vm288, %v633, 0
    %658 = vmatpush.bf16.msra.mxu0 0
    %659 = vmatpush.bf16.msra.mxu0 0
    %660 = vmatpush.bf16.msra.mxu0 0
    %661 = vmatpush.bf16.msra.mxu0 %v650
    %662 = vmatpush.bf16.msra.mxu0 %v628
    %663 = vmatpush.bf16.msra.mxu0 %v625
    %664 = vmatpush.bf16.msra.mxu0 %v622
    %665 = vmatpush.bf16.msra.mxu0 %v619
    %666 = vmatmul.bf16.gmra.mxu0 %v647
    %v667 = vpop.f32.mrf.mxu0
    %v668 = vadd.f32 %v568, %v667
    %v669 = vpop.f32.mrf.mxu0
    %v670 = vadd.f32 %v568, %v669
    %671 = vdwg.mxu0
    %672 = vmatpush.bf16.msra.mxu0 0
    %673 = vmatpush.bf16.msra.mxu0 0
    %674 = vmatpush.bf16.msra.mxu0 0
    %675 = vmatpush.bf16.msra.mxu0 %v653
    %676 = vmatpush.bf16.msra.mxu0 %v629
    %677 = vmatpush.bf16.msra.mxu0 %v626
    %678 = vmatpush.bf16.msra.mxu0 %v623
    %679 = vmatpush.bf16.msra.mxu0 %v620
    %680 = vmatmul.bf16.gmra.mxu0 %v647
    %v681 = vpop.f32.mrf.mxu0
    %v682 = vadd.f32 %v569, %v681
    %v683 = vpop.f32.mrf.mxu0
    %v684 = vadd.f32 %v569, %v683
    %685 = vdwg.mxu0
    %686 = vmatpush.bf16.msra.mxu0 0
    %687 = vmatpush.bf16.msra.mxu0 0
    %688 = vmatpush.bf16.msra.mxu0 0
    %689 = vmatpush.bf16.msra.mxu0 %v656
    %690 = vmatpush.bf16.msra.mxu0 %v630
    %691 = vmatpush.bf16.msra.mxu0 %v627
    %692 = vmatpush.bf16.msra.mxu0 %v624
    %693 = vmatpush.bf16.msra.mxu0 %v621
    %694 = vmatmul.bf16.gmra.mxu0 %v647
    %v695 = vpop.f32.mrf.mxu0
    %v696 = vadd.f32 %v570, %v695
    %v697 = vpop.f32.mrf.mxu0
    %v698 = vadd.f32 %v570, %v697
    %699 = vdwg.mxu0
    %vm700 = vcmp.gt.f32.partialorder %v668, 0.0
    %vm701 = vcmp.gt.f32.partialorder %v682, 0.0
    %vm702 = vcmp.gt.f32.partialorder %v670, 0.0
    %vm703 = vcmp.gt.f32.partialorder %v684, 0.0
    %v704 = vmul.f32 %v668, 0.01
    %v705 = vmul.f32 %v682, 0.01
    %v706 = vmul.f32 %v670, 0.01
    %v707 = vmul.f32 %v684, 0.01
    %v708 = vsel %vm700, %v668, %v704
    %v709 = vsel %vm701, %v682, %v705
    %v710 = vsel %vm702, %v670, %v706
    %v711 = vsel %vm703, %v684, %v707
    %v712 = vld [vmem:[#allocation13] sm:$0xff]
    %v713 = vld [vmem:[#allocation13 + $0x8] sm:$0xff]
    %v714 = vld [vmem:[#allocation13 + $0x10] sm:$0xff]
    %v715 = vld [vmem:[#allocation13 + $0x18] sm:$0xff]
    %v716 = vld [vmem:[#allocation13 + $0x20] sm:$0xff]
    %v717 = vld [vmem:[#allocation13 + $0x28] sm:$0xff]
    %v718 = vld [vmem:[#allocation13 + $0x30] sm:$0xff]
    %v719 = vld [vmem:[#allocation13 + $0x38] sm:$0xff]
    %v720 = vld [vmem:[#allocation13 + $0x40] sm:$0xff]
    %v721 = vld [vmem:[#allocation13 + $0x48] sm:$0xff]
    %v722 = vld [vmem:[#allocation13 + $0x50] sm:$0xff]
    %v723 = vld [vmem:[#allocation13 + $0x58] sm:$0xff]
    %v724 = vld [vmem:[#allocation13 + $0x60] sm:$0xff]
    %v725 = vld [vmem:[#allocation13 + $0x68] sm:$0xff]
    %v726 = vld [vmem:[#allocation13 + $0x70] sm:$0xff]
    %v727 = vld [vmem:[#allocation13 + $0x78] sm:$0xff]
    %v728 = vld [vmem:[#allocation13 + $0x80] sm:$0xff]
    %v729 = vld [vmem:[#allocation13 + $0x88] sm:$0xff]
    %v730 = vpack.c.bf16 %v710, %v708
    %v731 = vpack.c.bf16 %v711, %v709
    %v732 = vld [vmem:[#allocation14] sm:$0x3]
    %v734 = vperm.slane %v732, 0
    %v735 = vperm.slane %v732, 1
    %v756 = vunpack.c.l.b16 %v712
    %v757 = vunpack.c.h.b16 %v712
    %v758 = vunpack.c.l.b16 %v713
    %v759 = vunpack.c.h.b16 %v713
    %v760 = vunpack.c.l.b16 %v714
    %v761 = vunpack.c.h.b16 %v714
    %v762 = vunpack.c.l.b16 %v715
    %v763 = vunpack.c.h.b16 %v715
    %v764 = vunpack.c.l.b16 %v716
    %v765 = vunpack.c.h.b16 %v716
    %v766 = vunpack.c.l.b16 %v717
    %v767 = vunpack.c.h.b16 %v717
    %v768 = vunpack.c.l.b16 %v718
    %v769 = vunpack.c.h.b16 %v718
    %v770 = vunpack.c.l.b16 %v719
    %v771 = vunpack.c.h.b16 %v719
    %v772 = vunpack.c.l.b16 %v720
    %v773 = vunpack.c.h.b16 %v720
    %v774 = vunpack.c.l.b16 %v721
    %v775 = vunpack.c.h.b16 %v721
    %v776 = vunpack.c.l.b16 %v722
    %v777 = vunpack.c.h.b16 %v722
    %v778 = vunpack.c.l.b16 %v723
    %v779 = vunpack.c.h.b16 %v723
    %v780 = vunpack.c.l.b16 %v724
    %v781 = vunpack.c.h.b16 %v724
    %v782 = vunpack.c.l.b16 %v725
    %v783 = vunpack.c.h.b16 %v725
    %v784 = vunpack.c.l.b16 %v726
    %v785 = vunpack.c.h.b16 %v726
    %v786 = vunpack.c.l.b16 %v727
    %v787 = vunpack.c.h.b16 %v727
    %v788 = vunpack.c.l.b16 %v728
    %v789 = vunpack.c.h.b16 %v728
    %v790 = vunpack.c.l.b16 %v729
    %v791 = vunpack.c.h.b16 %v729
    %v792 = vpack.c.b16 %v758, %v756
    %v793 = vpack.c.b16 %v759, %v757
    %v794 = vpack.c.b16 %v762, %v760
    %v795 = vpack.c.b16 %v763, %v761
    %v796 = vpack.c.b16 %v766, %v764
    %v797 = vpack.c.b16 %v767, %v765
    %v798 = vpack.c.b16 %v770, %v768
    %v799 = vpack.c.b16 %v771, %v769
    %v800 = vpack.c.b16 %v774, %v772
    %v801 = vpack.c.b16 %v775, %v773
    %v802 = vpack.c.b16 %v778, %v776
    %v803 = vpack.c.b16 %v779, %v777
    %v804 = vpack.c.b16 %v782, %v780
    %v805 = vpack.c.b16 %v783, %v781
    %v806 = vpack.c.b16 %v786, %v784
    %v807 = vpack.c.b16 %v787, %v785
    %v808 = vpack.c.b16 %v790, %v788
    %v809 = vpack.c.b16 %v791, %v789
    %vm828 = vcmask 130048
    %v830 = vsel %vm828, %v731, 0
    %832 = vmatpush.bf16.msra.mxu0 %v806
    %833 = vmatpush.bf16.msra.mxu0 %v804
    %834 = vmatpush.bf16.msra.mxu0 %v802
    %835 = vmatpush.bf16.msra.mxu0 %v800
    %836 = vmatpush.bf16.msra.mxu0 %v798
    %837 = vmatpush.bf16.msra.mxu0 %v796
    %838 = vmatpush.bf16.msra.mxu0 %v794
    %839 = vmatpush.bf16.msra.mxu0 %v792
    %840 = vmatmul.bf16.gmra.mxu0 %v730
    %v841 = vpop.f32.mrf.mxu0
    %v842 = vadd.f32 %v734, %v841
    %v843 = vpop.f32.mrf.mxu0
    %v844 = vadd.f32 %v734, %v843
    %845 = vdwg.mxu0
    %846 = vmatpush.bf16.msra.mxu0 0
    %847 = vmatpush.bf16.msra.mxu0 0
    %848 = vmatpush.bf16.msra.mxu0 0
    %849 = vmatpush.bf16.msra.mxu0 0
    %850 = vmatpush.bf16.msra.mxu0 0
    %851 = vmatpush.bf16.msra.mxu0 0
    %852 = vmatpush.bf16.msra.mxu0 0
    %853 = vmatpush.bf16.msra.mxu0 %v808
    %854 = vmatmul.bf16.gmra.mxu0 %v830
    %v855 = vpop.f32.mrf.mxu0
    %v856 = vadd.f32 %v842, %v855
    %v857 = vpop.f32.mrf.mxu0
    %v858 = vadd.f32 %v844, %v857
    %859 = vdwg.mxu0
    %860 = vmatpush.bf16.msra.mxu0 %v807
    %861 = vmatpush.bf16.msra.mxu0 %v805
    %862 = vmatpush.bf16.msra.mxu0 %v803
    %863 = vmatpush.bf16.msra.mxu0 %v801
    %864 = vmatpush.bf16.msra.mxu0 %v799
    %865 = vmatpush.bf16.msra.mxu0 %v797
    %866 = vmatpush.bf16.msra.mxu0 %v795
    %867 = vmatpush.bf16.msra.mxu0 %v793
    %868 = vmatmul.bf16.gmra.mxu0 %v730
    %v869 = vpop.f32.mrf.mxu0
    %v870 = vadd.f32 %v735, %v869
    %v871 = vpop.f32.mrf.mxu0
    %v872 = vadd.f32 %v735, %v871
    %873 = vdwg.mxu0
    %874 = vmatpush.bf16.msra.mxu0 0
    %875 = vmatpush.bf16.msra.mxu0 0
    %876 = vmatpush.bf16.msra.mxu0 0
    %877 = vmatpush.bf16.msra.mxu0 0
    %878 = vmatpush.bf16.msra.mxu0 0
    %879 = vmatpush.bf16.msra.mxu0 0
    %880 = vmatpush.bf16.msra.mxu0 0
    %881 = vmatpush.bf16.msra.mxu0 %v809
    %882 = vmatmul.bf16.gmra.mxu0 %v830
    %v883 = vpop.f32.mrf.mxu0
    %v884 = vadd.f32 %v870, %v883
    %v885 = vpop.f32.mrf.mxu0
    %v886 = vadd.f32 %v872, %v885
    %887 = vdwg.mxu0
    %vm888 = vcmp.gt.f32.partialorder %v856, 0.0
    %vm889 = vcmp.gt.f32.partialorder %v884, 0.0
    %vm890 = vcmp.gt.f32.partialorder %v858, 0.0
    %vm891 = vcmp.gt.f32.partialorder %v886, 0.0
    %v892 = vmul.f32 %v856, 0.01
    %v893 = vmul.f32 %v884, 0.01
    %v894 = vmul.f32 %v858, 0.01
    %v895 = vmul.f32 %v886, 0.01
    %v896 = vsel %vm888, %v856, %v892
    %v897 = vsel %vm889, %v884, %v893
    %v898 = vsel %vm890, %v858, %v894
    %v899 = vsel %vm891, %v886, %v895
    %904 = vrot.lane.b32.xlu0 %v682, 112
    %v905 = vpop.permute.xlu0 %904
    %906 = vrot.lane.b32.xlu0 %v696, 112
    %v907 = vpop.permute.xlu0 %906
    %908 = vrot.lane.b32.xlu0 %v684, 112
    %v909 = vpop.permute.xlu0 %908
    %910 = vrot.lane.b32.xlu0 %v698, 112
    %v911 = vpop.permute.xlu0 %910
    %vm912 = vcmask 916480
    %v913 = vsel %vm912, %v905, %v907
    %v914 = vsel %vm912, %v909, %v911
    %v919 = vadd.f32 %v896, %v913
    %v920 = vadd.f32 %v897, %v907
    %v921 = vadd.f32 %v898, %v914
    %v922 = vadd.f32 %v899, %v911
    %v923 = vld [vmem:[#allocation16] sm:$0xff]
    %v924 = vld [vmem:[#allocation16 + $0x8] sm:$0xf]
    %v925 = vld [vmem:[#allocation16 + $0xc] sm:$0xff]
    %v926 = vld [vmem:[#allocation16 + $0x14] sm:$0xf]
    %v927 = vld [vmem:[#allocation16 + $0x18] sm:$0xff]
    %v928 = vld [vmem:[#allocation16 + $0x20] sm:$0xf]
    %v929 = vld [vmem:[#allocation16 + $0x24] sm:$0xff]
    %v930 = vld [vmem:[#allocation16 + $0x2c] sm:$0xf]
    %v931 = vld [vmem:[#allocation16 + $0x30] sm:$0xff]
    %v932 = vld [vmem:[#allocation16 + $0x38] sm:$0xf]
    %v933 = vld [vmem:[#allocation16 + $0x3c] sm:$0xff]
    %v934 = vld [vmem:[#allocation16 + $0x44] sm:$0xf]
    %v935 = vld [vmem:[#allocation16 + $0x48] sm:$0xff]
    %v936 = vld [vmem:[#allocation16 + $0x50] sm:$0xf]
    %v937 = vld [vmem:[#allocation16 + $0x54] sm:$0xff]
    %v938 = vld [vmem:[#allocation16 + $0x5c] sm:$0xf]
    %v939 = vld [vmem:[#allocation16 + $0x60] sm:$0xff]
    %v940 = vld [vmem:[#allocation16 + $0x68] sm:$0xf]
    %v941 = vld [vmem:[#allocation16 + $0x6c] sm:$0xff]
    %v942 = vld [vmem:[#allocation16 + $0x74] sm:$0xf]
    %v943 = vld [vmem:[#allocation16 + $0x78] sm:$0xff]
    %v944 = vld [vmem:[#allocation16 + $0x80] sm:$0xf]
    %v945 = vld [vmem:[#allocation16 + $0x84] sm:$0xff]
    %v946 = vld [vmem:[#allocation16 + $0x8c] sm:$0xf]
    %v947 = vld [vmem:[#allocation16 + $0x90] sm:$0xff]
    %v948 = vld [vmem:[#allocation16 + $0x98] sm:$0xf]
    %v949 = vld [vmem:[#allocation16 + $0x9c] sm:$0xff]
    %v950 = vld [vmem:[#allocation16 + $0xa4] sm:$0xf]
    %v951 = vld [vmem:[#allocation16 + $0xa8] sm:$0xff]
    %v952 = vld [vmem:[#allocation16 + $0xb0] sm:$0xf]
    %v953 = vld [vmem:[#allocation16 + $0xb4] sm:$0xff]
    %v954 = vld [vmem:[#allocation16 + $0xbc] sm:$0xf]
    %v955 = vld [vmem:[#allocation16 + $0xc0] sm:$0xff]
    %v956 = vld [vmem:[#allocation16 + $0xc8] sm:$0xf]
    %v957 = vld [vmem:[#allocation16 + $0xcc] sm:$0xff]
    %v958 = vld [vmem:[#allocation16 + $0xd4] sm:$0xf]
    %v959 = vpack.c.bf16 %v921, %v919
    %v960 = vpack.c.bf16 %v922, %v920
    %v961 = vld [vmem:[%s10] sm:$0x7]
    %v963 = vperm.slane %v961, 0
    %v964 = vperm.slane %v961, 1
    %v965 = vperm.slane %v961, 2
    %v1005 = vunpack.c.l.b16 %v923
    %v1006 = vunpack.c.h.b16 %v923
    %v1007 = vunpack.c.l.b16 %v924
    %v1008 = vunpack.c.l.b16 %v925
    %v1009 = vunpack.c.h.b16 %v925
    %v1010 = vunpack.c.l.b16 %v926
    %v1011 = vunpack.c.l.b16 %v927
    %v1012 = vunpack.c.h.b16 %v927
    %v1013 = vunpack.c.l.b16 %v928
    %v1014 = vunpack.c.l.b16 %v929
    %v1015 = vunpack.c.h.b16 %v929
    %v1016 = vunpack.c.l.b16 %v930
    %v1017 = vunpack.c.l.b16 %v931
    %v1018 = vunpack.c.h.b16 %v931
    %v1019 = vunpack.c.l.b16 %v932
    %v1020 = vunpack.c.l.b16 %v933
    %v1021 = vunpack.c.h.b16 %v933
    %v1022 = vunpack.c.l.b16 %v934
    %v1023 = vunpack.c.l.b16 %v935
    %v1024 = vunpack.c.h.b16 %v935
    %v1025 = vunpack.c.l.b16 %v936
    %v1026 = vunpack.c.l.b16 %v937
    %v1027 = vunpack.c.h.b16 %v937
    %v1028 = vunpack.c.l.b16 %v938
    %v1029 = vunpack.c.l.b16 %v939
    %v1030 = vunpack.c.h.b16 %v939
    %v1031 = vunpack.c.l.b16 %v940
    %v1032 = vunpack.c.l.b16 %v941
    %v1033 = vunpack.c.h.b16 %v941
    %v1034 = vunpack.c.l.b16 %v942
    %v1035 = vunpack.c.l.b16 %v943
    %v1036 = vunpack.c.h.b16 %v943
    %v1037 = vunpack.c.l.b16 %v944
    %v1038 = vunpack.c.l.b16 %v945
    %v1039 = vunpack.c.h.b16 %v945
    %v1040 = vunpack.c.l.b16 %v946
    %v1041 = vunpack.c.l.b16 %v947
    %v1042 = vunpack.c.h.b16 %v947
    %v1043 = vunpack.c.l.b16 %v948
    %v1044 = vunpack.c.l.b16 %v949
    %v1045 = vunpack.c.h.b16 %v949
    %v1046 = vunpack.c.l.b16 %v950
    %v1047 = vunpack.c.l.b16 %v951
    %v1048 = vunpack.c.h.b16 %v951
    %v1049 = vunpack.c.l.b16 %v952
    %v1050 = vunpack.c.l.b16 %v953
    %v1051 = vunpack.c.h.b16 %v953
    %v1052 = vunpack.c.l.b16 %v954
    %v1053 = vunpack.c.l.b16 %v955
    %v1054 = vunpack.c.h.b16 %v955
    %v1055 = vunpack.c.l.b16 %v956
    %v1056 = vunpack.c.l.b16 %v957
    %v1057 = vunpack.c.h.b16 %v957
    %v1058 = vunpack.c.l.b16 %v958
    %v1059 = vpack.c.b16 %v1008, %v1005
    %v1060 = vpack.c.b16 %v1009, %v1006
    %v1061 = vpack.c.b16 %v1010, %v1007
    %v1062 = vpack.c.b16 %v1014, %v1011
    %v1063 = vpack.c.b16 %v1015, %v1012
    %v1064 = vpack.c.b16 %v1016, %v1013
    %v1065 = vpack.c.b16 %v1020, %v1017
    %v1066 = vpack.c.b16 %v1021, %v1018
    %v1067 = vpack.c.b16 %v1022, %v1019
    %v1068 = vpack.c.b16 %v1026, %v1023
    %v1069 = vpack.c.b16 %v1027, %v1024
    %v1070 = vpack.c.b16 %v1028, %v1025
    %v1071 = vpack.c.b16 %v1032, %v1029
    %v1072 = vpack.c.b16 %v1033, %v1030
    %v1073 = vpack.c.b16 %v1034, %v1031
    %v1074 = vpack.c.b16 %v1038, %v1035
    %v1075 = vpack.c.b16 %v1039, %v1036
    %v1076 = vpack.c.b16 %v1040, %v1037
    %v1077 = vpack.c.b16 %v1044, %v1041
    %v1078 = vpack.c.b16 %v1045, %v1042
    %v1079 = vpack.c.b16 %v1046, %v1043
    %v1080 = vpack.c.b16 %v1050, %v1047
    %v1081 = vpack.c.b16 %v1051, %v1048
    %v1082 = vpack.c.b16 %v1052, %v1049
    %v1083 = vpack.c.b16 %v1056, %v1053
    %v1084 = vpack.c.b16 %v1057, %v1054
    %v1085 = vpack.c.b16 %v1058, %v1055
    %v1114 = vsel %vm828, %v960, 0
    %1116 = vmatpush.bf16.msra.mxu0 %v1080
    %1117 = vmatpush.bf16.msra.mxu0 %v1077
    %1118 = vmatpush.bf16.msra.mxu0 %v1074
    %1119 = vmatpush.bf16.msra.mxu0 %v1071
    %1120 = vmatpush.bf16.msra.mxu0 %v1068
    %1121 = vmatpush.bf16.msra.mxu0 %v1065
    %1122 = vmatpush.bf16.msra.mxu0 %v1062
    %1123 = vmatpush.bf16.msra.mxu0 %v1059
    %1124 = vmatmul.bf16.gmra.mxu0 %v959
    %v1125 = vpop.f32.mrf.mxu0
    %v1126 = vadd.f32 %v963, %v1125
    %v1127 = vpop.f32.mrf.mxu0
    %v1128 = vadd.f32 %v963, %v1127
    %1129 = vdwg.mxu0
    %1130 = vmatpush.bf16.msra.mxu0 0
    %1131 = vmatpush.bf16.msra.mxu0 0
    %1132 = vmatpush.bf16.msra.mxu0 0
    %1133 = vmatpush.bf16.msra.mxu0 0
    %1134 = vmatpush.bf16.msra.mxu0 0
    %1135 = vmatpush.bf16.msra.mxu0 0
    %1136 = vmatpush.bf16.msra.mxu0 0
    %1137 = vmatpush.bf16.msra.mxu0 %v1083
    %1138 = vmatmul.bf16.gmra.mxu0 %v1114
    %v1139 = vpop.f32.mrf.mxu0
    %v1140 = vadd.f32 %v1126, %v1139
    %v1141 = vpop.f32.mrf.mxu0
    %v1142 = vadd.f32 %v1128, %v1141
    %1143 = vdwg.mxu0
    %1144 = vmatpush.bf16.msra.mxu0 %v1081
    %1145 = vmatpush.bf16.msra.mxu0 %v1078
    %1146 = vmatpush.bf16.msra.mxu0 %v1075
    %1147 = vmatpush.bf16.msra.mxu0 %v1072
    %1148 = vmatpush.bf16.msra.mxu0 %v1069
    %1149 = vmatpush.bf16.msra.mxu0 %v1066
    %1150 = vmatpush.bf16.msra.mxu0 %v1063
    %1151 = vmatpush.bf16.msra.mxu0 %v1060
    %1152 = vmatmul.bf16.gmra.mxu0 %v959
    %v1153 = vpop.f32.mrf.mxu0
    %v1154 = vadd.f32 %v964, %v1153
    %v1155 = vpop.f32.mrf.mxu0
    %v1156 = vadd.f32 %v964, %v1155
    %1157 = vdwg.mxu0
    %1158 = vmatpush.bf16.msra.mxu0 0
    %1159 = vmatpush.bf16.msra.mxu0 0
    %1160 = vmatpush.bf16.msra.mxu0 0
    %1161 = vmatpush.bf16.msra.mxu0 0
    %1162 = vmatpush.bf16.msra.mxu0 0
    %1163 = vmatpush.bf16.msra.mxu0 0
    %1164 = vmatpush.bf16.msra.mxu0 0
    %1165 = vmatpush.bf16.msra.mxu0 %v1084
    %1166 = vmatmul.bf16.gmra.mxu0 %v1114
    %v1167 = vpop.f32.mrf.mxu0
    %v1168 = vadd.f32 %v1154, %v1167
    %v1169 = vpop.f32.mrf.mxu0
    %v1170 = vadd.f32 %v1156, %v1169
    %1171 = vdwg.mxu0
    %1172 = vmatpush.bf16.msra.mxu0 %v1082
    %1173 = vmatpush.bf16.msra.mxu0 %v1079
    %1174 = vmatpush.bf16.msra.mxu0 %v1076
    %1175 = vmatpush.bf16.msra.mxu0 %v1073
    %1176 = vmatpush.bf16.msra.mxu0 %v1070
    %1177 = vmatpush.bf16.msra.mxu0 %v1067
    %1178 = vmatpush.bf16.msra.mxu0 %v1064
    %1179 = vmatpush.bf16.msra.mxu0 %v1061
    %1180 = vmatmul.bf16.gmra.mxu0 %v959
    %v1181 = vpop.f32.mrf.mxu0
    %v1182 = vadd.f32 %v965, %v1181
    %v1183 = vpop.f32.mrf.mxu0
    %v1184 = vadd.f32 %v965, %v1183
    %1185 = vdwg.mxu0
    %1186 = vmatpush.bf16.msra.mxu0 0
    %1187 = vmatpush.bf16.msra.mxu0 0
    %1188 = vmatpush.bf16.msra.mxu0 0
    %1189 = vmatpush.bf16.msra.mxu0 0
    %1190 = vmatpush.bf16.msra.mxu0 0
    %1191 = vmatpush.bf16.msra.mxu0 0
    %1192 = vmatpush.bf16.msra.mxu0 0
    %1193 = vmatpush.bf16.msra.mxu0 %v1085
    %1194 = vmatmul.bf16.gmra.mxu0 %v1114
    %v1195 = vpop.f32.mrf.mxu0
    %v1196 = vadd.f32 %v1182, %v1195
    %v1197 = vpop.f32.mrf.mxu0
    %v1198 = vadd.f32 %v1184, %v1197
    %1199 = vdwg.mxu0
    %vm1200 = vcmp.gt.f32.partialorder %v1140, 0.0
    %vm1201 = vcmp.gt.f32.partialorder %v1168, 0.0
    %vm1202 = vcmp.gt.f32.partialorder %v1196, 0.0
    %vm1203 = vcmp.gt.f32.partialorder %v1142, 0.0
    %vm1204 = vcmp.gt.f32.partialorder %v1170, 0.0
    %vm1205 = vcmp.gt.f32.partialorder %v1198, 0.0
    %v1206 = vmul.f32 %v1140, 0.01
    %v1207 = vmul.f32 %v1168, 0.01
    %v1208 = vmul.f32 %v1196, 0.01
    %v1209 = vmul.f32 %v1142, 0.01
    %v1210 = vmul.f32 %v1170, 0.01
    %v1211 = vmul.f32 %v1198, 0.01
    %v1212 = vsel %vm1200, %v1140, %v1206
    %v1213 = vsel %vm1201, %v1168, %v1207
    %v1214 = vsel %vm1202, %v1196, %v1208
    %v1215 = vsel %vm1203, %v1142, %v1209
    %v1216 = vsel %vm1204, %v1170, %v1210
    %v1217 = vsel %vm1205, %v1198, %v1211
    %v1218 = vld [vmem:[#allocation17] sm:$0xf]
    %v1219 = vld [vmem:[#allocation17 + $0x4] sm:$0xf]
    %v1220 = vld [vmem:[#allocation17 + $0x8] sm:$0xf]
    %v1221 = vld [vmem:[#allocation17 + $0xc] sm:$0xf]
    %v1222 = vld [vmem:[#allocation17 + $0x10] sm:$0xf]
    %v1223 = vld [vmem:[#allocation17 + $0x14] sm:$0xf]
    %v1224 = vld [vmem:[#allocation17 + $0x18] sm:$0xf]
    %v1225 = vld [vmem:[#allocation17 + $0x1c] sm:$0xf]
    %v1226 = vld [vmem:[#allocation17 + $0x20] sm:$0xf]
    %v1227 = vld [vmem:[#allocation17 + $0x24] sm:$0xf]
    %v1228 = vld [vmem:[#allocation17 + $0x28] sm:$0xf]
    %v1229 = vld [vmem:[#allocation17 + $0x2c] sm:$0xf]
    %v1230 = vld [vmem:[#allocation17 + $0x30] sm:$0xf]
    %v1231 = vld [vmem:[#allocation17 + $0x34] sm:$0xf]
    %v1232 = vld [vmem:[#allocation17 + $0x38] sm:$0xf]
    %v1233 = vld [vmem:[#allocation17 + $0x3c] sm:$0xf]
    %v1234 = vld [vmem:[#allocation17 + $0x40] sm:$0xf]
    %v1235 = vld [vmem:[#allocation17 + $0x44] sm:$0xf]
    %v1236 = vld [vmem:[#allocation17 + $0x48] sm:$0xf]
    %v1237 = vld [vmem:[#allocation17 + $0x4c] sm:$0xf]
    %v1238 = vld [vmem:[#allocation17 + $0x50] sm:$0xf]
    %v1239 = vld [vmem:[#allocation17 + $0x54] sm:$0xf]
    %v1240 = vld [vmem:[#allocation17 + $0x58] sm:$0xf]
    %v1241 = vld [vmem:[#allocation17 + $0x5c] sm:$0xf]
    %v1242 = vld [vmem:[#allocation17 + $0x60] sm:$0xf]
    %v1243 = vld [vmem:[#allocation17 + $0x64] sm:$0xf]
    %v1244 = vld [vmem:[#allocation17 + $0x68] sm:$0xf]
    %v1245 = vld [vmem:[#allocation17 + $0x6c] sm:$0xf]
    %v1246 = vld [vmem:[#allocation17 + $0x70] sm:$0xf]
    %v1247 = vld [vmem:[#allocation17 + $0x74] sm:$0xf]
    %v1248 = vld [vmem:[#allocation17 + $0x78] sm:$0xf]
    %v1249 = vld [vmem:[#allocation17 + $0x7c] sm:$0xf]
    %v1250 = vld [vmem:[#allocation17 + $0x80] sm:$0xf]
    %v1251 = vld [vmem:[#allocation17 + $0x84] sm:$0xf]
    %v1252 = vld [vmem:[#allocation17 + $0x88] sm:$0xf]
    %v1253 = vld [vmem:[#allocation17 + $0x8c] sm:$0xf]
    %v1254 = vpack.c.bf16 %v1215, %v1212
    %v1255 = vpack.c.bf16 %v1216, %v1213
    %v1256 = vpack.c.bf16 %v1217, %v1214
    %v1257 = vld [vmem:[%s12] sm:$0x1]
    %v1259 = vperm.slane %v1257, 0
    %v1297 = vunpack.c.l.b16 %v1218
    %v1298 = vunpack.c.l.b16 %v1219
    %v1299 = vunpack.c.l.b16 %v1220
    %v1300 = vunpack.c.l.b16 %v1221
    %v1301 = vunpack.c.l.b16 %v1222
    %v1302 = vunpack.c.l.b16 %v1223
    %v1303 = vunpack.c.l.b16 %v1224
    %v1304 = vunpack.c.l.b16 %v1225
    %v1305 = vunpack.c.l.b16 %v1226
    %v1306 = vunpack.c.l.b16 %v1227
    %v1307 = vunpack.c.l.b16 %v1228
    %v1308 = vunpack.c.l.b16 %v1229
    %v1309 = vunpack.c.l.b16 %v1230
    %v1310 = vunpack.c.l.b16 %v1231
    %v1311 = vunpack.c.l.b16 %v1232
    %v1312 = vunpack.c.l.b16 %v1233
    %v1313 = vunpack.c.l.b16 %v1234
    %v1314 = vunpack.c.l.b16 %v1235
    %v1315 = vunpack.c.l.b16 %v1236
    %v1316 = vunpack.c.l.b16 %v1237
    %v1317 = vunpack.c.l.b16 %v1238
    %v1318 = vunpack.c.l.b16 %v1239
    %v1319 = vunpack.c.l.b16 %v1240
    %v1320 = vunpack.c.l.b16 %v1241
    %v1321 = vunpack.c.l.b16 %v1242
    %v1322 = vunpack.c.l.b16 %v1243
    %v1323 = vunpack.c.l.b16 %v1244
    %v1324 = vunpack.c.l.b16 %v1245
    %v1325 = vunpack.c.l.b16 %v1246
    %v1326 = vunpack.c.l.b16 %v1247
    %v1327 = vunpack.c.l.b16 %v1248
    %v1328 = vunpack.c.l.b16 %v1249
    %v1329 = vunpack.c.l.b16 %v1250
    %v1330 = vunpack.c.l.b16 %v1251
    %v1331 = vunpack.c.l.b16 %v1252
    %v1332 = vunpack.c.l.b16 %v1253
    %v1333 = vpack.c.b16 %v1298, %v1297
    %v1334 = vpack.c.b16 %v1300, %v1299
    %v1335 = vpack.c.b16 %v1302, %v1301
    %v1336 = vpack.c.b16 %v1304, %v1303
    %v1337 = vpack.c.b16 %v1306, %v1305
    %v1338 = vpack.c.b16 %v1308, %v1307
    %v1339 = vpack.c.b16 %v1310, %v1309
    %v1340 = vpack.c.b16 %v1312, %v1311
    %v1341 = vpack.c.b16 %v1314, %v1313
    %v1342 = vpack.c.b16 %v1316, %v1315
    %v1343 = vpack.c.b16 %v1318, %v1317
    %v1344 = vpack.c.b16 %v1320, %v1319
    %v1345 = vpack.c.b16 %v1322, %v1321
    %v1346 = vpack.c.b16 %v1324, %v1323
    %v1347 = vpack.c.b16 %v1326, %v1325
    %v1348 = vpack.c.b16 %v1328, %v1327
    %v1349 = vpack.c.b16 %v1330, %v1329
    %v1350 = vpack.c.b16 %v1332, %v1331
    %vm1369 = vcmask 261120
    %v1371 = vsel %vm1369, %v1256, 0
    %1373 = vmatpush.bf16.msra.mxu0 %v1340
    %1374 = vmatpush.bf16.msra.mxu0 %v1339
    %1375 = vmatpush.bf16.msra.mxu0 %v1338
    %1376 = vmatpush.bf16.msra.mxu0 %v1337
    %1377 = vmatpush.bf16.msra.mxu0 %v1336
    %1378 = vmatpush.bf16.msra.mxu0 %v1335
    %1379 = vmatpush.bf16.msra.mxu0 %v1334
    %1380 = vmatpush.bf16.msra.mxu0 %v1333
    %1381 = vmatmul.bf16.gmra.mxu0 %v1254
    %v1382 = vpop.f32.mrf.mxu0
    %v1383 = vadd.f32 %v1259, %v1382
    %v1384 = vpop.f32.mrf.mxu0
    %v1385 = vadd.f32 %v1259, %v1384
    %1386 = vdwg.mxu0
    %1387 = vmatpush.bf16.msra.mxu0 %v1348
    %1388 = vmatpush.bf16.msra.mxu0 %v1347
    %1389 = vmatpush.bf16.msra.mxu0 %v1346
    %1390 = vmatpush.bf16.msra.mxu0 %v1345
    %1391 = vmatpush.bf16.msra.mxu0 %v1344
    %1392 = vmatpush.bf16.msra.mxu0 %v1343
    %1393 = vmatpush.bf16.msra.mxu0 %v1342
    %1394 = vmatpush.bf16.msra.mxu0 %v1341
    %1395 = vmatmul.bf16.gmra.mxu0 %v1255
    %v1396 = vpop.f32.mrf.mxu0
    %v1397 = vadd.f32 %v1383, %v1396
    %v1398 = vpop.f32.mrf.mxu0
    %v1399 = vadd.f32 %v1385, %v1398
    %1400 = vdwg.mxu0
    %1401 = vmatpush.bf16.msra.mxu0 0
    %1402 = vmatpush.bf16.msra.mxu0 0
    %1403 = vmatpush.bf16.msra.mxu0 0
    %1404 = vmatpush.bf16.msra.mxu0 0
    %1405 = vmatpush.bf16.msra.mxu0 0
    %1406 = vmatpush.bf16.msra.mxu0 0
    %1407 = vmatpush.bf16.msra.mxu0 %v1350
    %1408 = vmatpush.bf16.msra.mxu0 %v1349
    %1409 = vmatmul.bf16.gmra.mxu0 %v1371
    %v1410 = vpop.f32.mrf.mxu0
    %v1411 = vadd.f32 %v1397, %v1410
    %v1412 = vpop.f32.mrf.mxu0
    %v1413 = vadd.f32 %v1399, %v1412
    %1414 = vdwg.mxu0
    %vm1415 = vcmp.gt.f32.partialorder %v1411, 0.0
    %vm1416 = vcmp.gt.f32.partialorder %v1413, 0.0
    %v1417 = vmul.f32 %v1411, 0.01
    %v1418 = vmul.f32 %v1413, 0.01
    %v1419 = vsel %vm1415, %v1411, %v1417
    %v1420 = vsel %vm1416, %v1413, %v1418
    %v1421 = vld [vmem:[#allocation19] sm:$0xf]
    %v1422 = vld [vmem:[#allocation19 + $0x4] sm:$0xf]
    %v1423 = vld [vmem:[#allocation19 + $0x8] sm:$0xf]
    %v1424 = vld [vmem:[#allocation19 + $0xc] sm:$0xf]
    %v1425 = vld [vmem:[#allocation19 + $0x10] sm:$0xf]
    %v1426 = vld [vmem:[#allocation19 + $0x14] sm:$0xf]
    %v1427 = vld [vmem:[#allocation19 + $0x18] sm:$0xf]
    %v1428 = vld [vmem:[#allocation19 + $0x1c] sm:$0xf]
    %v1429 = vld [vmem:[#allocation19 + $0x20] sm:$0xf]
    %v1430 = vld [vmem:[#allocation19 + $0x24] sm:$0xf]
    %v1431 = vld [vmem:[#allocation19 + $0x28] sm:$0xf]
    %v1432 = vld [vmem:[#allocation19 + $0x2c] sm:$0xf]
    %v1433 = vld [vmem:[#allocation19 + $0x30] sm:$0xf]
    %v1434 = vld [vmem:[#allocation19 + $0x34] sm:$0xf]
    %v1435 = vld [vmem:[#allocation19 + $0x38] sm:$0xf]
    %v1436 = vld [vmem:[#allocation19 + $0x3c] sm:$0xf]
    %v1437 = vpack.c.bf16 %v1420, %v1419
    %v1438 = vld [vmem:[%s14] sm:$0x1]
    %v1440 = vperm.slane %v1438, 0
    %v1458 = vunpack.c.l.b16 %v1421
    %v1459 = vunpack.c.l.b16 %v1422
    %v1460 = vunpack.c.l.b16 %v1423
    %v1461 = vunpack.c.l.b16 %v1424
    %v1462 = vunpack.c.l.b16 %v1425
    %v1463 = vunpack.c.l.b16 %v1426
    %v1464 = vunpack.c.l.b16 %v1427
    %v1465 = vunpack.c.l.b16 %v1428
    %v1466 = vunpack.c.l.b16 %v1429
    %v1467 = vunpack.c.l.b16 %v1430
    %v1468 = vunpack.c.l.b16 %v1431
    %v1469 = vunpack.c.l.b16 %v1432
    %v1470 = vunpack.c.l.b16 %v1433
    %v1471 = vunpack.c.l.b16 %v1434
    %v1472 = vunpack.c.l.b16 %v1435
    %v1473 = vunpack.c.l.b16 %v1436
    %v1474 = vpack.c.b16 %v1459, %v1458
    %v1475 = vpack.c.b16 %v1461, %v1460
    %v1476 = vpack.c.b16 %v1463, %v1462
    %v1477 = vpack.c.b16 %v1465, %v1464
    %v1478 = vpack.c.b16 %v1467, %v1466
    %v1479 = vpack.c.b16 %v1469, %v1468
    %v1480 = vpack.c.b16 %v1471, %v1470
    %v1481 = vpack.c.b16 %v1473, %v1472
    %1490 = vmatpush.bf16.msra.mxu0 %v1481
    %1491 = vmatpush.bf16.msra.mxu0 %v1480
    %1492 = vmatpush.bf16.msra.mxu0 %v1479
    %1493 = vmatpush.bf16.msra.mxu0 %v1478
    %1494 = vmatpush.bf16.msra.mxu0 %v1477
    %1495 = vmatpush.bf16.msra.mxu0 %v1476
    %1496 = vmatpush.bf16.msra.mxu0 %v1475
    %1497 = vmatpush.bf16.msra.mxu0 %v1474
    %1498 = vmatmul.bf16.gmra.mxu0 %v1437
    %v1499 = vpop.f32.mrf.mxu0
    %v1500 = vadd.f32 %v1440, %v1499
    %v1501 = vpop.f32.mrf.mxu0
    %v1502 = vadd.f32 %v1440, %v1501
    %1503 = vdwg.mxu0
    %1504 = vmax.xlane.f32.xlu0 %v1500
    %v1505 = vpop.xlane.xlu0 %1504
    %1506 = vmax.xlane.f32.xlu0 %v1502
    %v1507 = vpop.xlane.xlu0 %1506
    %v1508 = vsub.f32 %v1500, %v1505
    %v1509 = vsub.f32 %v1502, %v1507
    %v1510 = vmul.f32 %v1508, 1.442695
    %v1511 = vpow.pop %v1510
    %v1512 = vmul.f32 %v1509, 1.442695
    %v1513 = vpow.pop %v1512
    %1514 = vadd.xlane.f32.xlu0 %v1511
    %v1515 = vpop.xlane.xlu0 %1514
    %1516 = vadd.xlane.f32.xlu0 %v1513
    %v1517 = vpop.xlane.xlu0 %1516
    %v1518 = vlog2.pop %v1515
    %v1519 = vmul.f32 %v1518, 0.6931472
    %v1520 = vlog2.pop %v1517
    %v1521 = vmul.f32 %v1520, 0.6931472
    %v1522 = vsub.f32 %v1508, %v1519
    %v1523 = vsub.f32 %v1509, %v1521
    %1524 = vst [vmem:[#allocation20] sm:$0xff] %v1522
    %1525 = vst [vmem:[#allocation20 + $0x8] sm:$0xff] %v1523
    // Predicated region
    $region106: #{tpu_custom_call.1} parent=1 // pred_check
      _
    $region107: #{tpu_custom_call.1} parent=1 // pred_check_branch
      %1527 = sbr.rel (0) target = $region109
    $region108: #{tpu_custom_call.1} parent=1 // pred_region
      %1529 = vsyncadd [#allocation4], 0
      %s1530 = sshll.u32 [#allocation20], 4
      %s1531 = int_to_ptr.vmem [resolvable:$true] %s1530
      %s1532 = sshll.u32 %s15, 4
      %s1533 = int_to_ptr.hbm [resolvable:$true] %s1532
      %1538 = dma.vmem_to_hbm [thread:$0]  %s1531, 256, %s1533, [#allocation4], 128, 128, 8
    $region109: #{tpu_custom_call.1} parent=1 // pred_fallthru
      _
    // Predicated region
    $region110: #{tpu_custom_call.1} parent=1 // pred_check
      _
    $region111: #{tpu_custom_call.1} parent=1 // pred_check_branch
      %1540 = sbr.rel (0) target = $region113
    $region112: #{tpu_custom_call.1} parent=1 // pred_region
      %1542 = dma.done [#allocation4], 256
    $region113: #{tpu_custom_call.1} parent=1 // pred_fallthru
      _
    %1543 = vsyncpa [#allocation3], 1
    %1544 = vsyncpa [#allocation6], 1
    %1545 = vsyncpa [#allocation9], 1
    %1546 = vsyncpa [#allocation12], 1
    %1547 = vsyncpa [#allocation15], 1
    %1548 = vsyncpa [#allocation18], 1
    %1549 = vsyncpa [#allocation4], 1

</llo_original>
